<compile_context>
chip_gen: v5e
topology: v5e:2x2
jax: 0.10.0
libtpu: 0.0.40
codegen_flags: <defaults>
</compile_context>

<pallas_src>
import jax
import jax.numpy as jnp
from jax.experimental import pallas as pl
from jax.experimental.pallas import tpu as pltpu


# ----------------------------------------------------------------------------
# Kernel
# ----------------------------------------------------------------------------
def edge_mlp_kernel(src_ref, dest_ref, edge_ref,
                    w1a_ref, w1b_ref, w1c_ref, b1_ref,
                    w2_ref, b2_ref, out_ref):
    # Linear(3D -> D) on the (virtual) concatenation, as a split matmul.
    # bf16 operands, f32 accumulation on the MXU.
    h = (jnp.dot(src_ref[...],  w1a_ref[...], preferred_element_type=jnp.float32)
         + jnp.dot(dest_ref[...], w1b_ref[...], preferred_element_type=jnp.float32)
         + jnp.dot(edge_ref[...], w1c_ref[...], preferred_element_type=jnp.float32))
    h = jnp.maximum(h + b1_ref[...], 0.0)          # bias + ReLU in f32 (VPU)
    h = h.astype(w2_ref.dtype)                     # back to bf16 for the MXU
    out = jnp.dot(h, w2_ref[...], preferred_element_type=jnp.float32) + b2_ref[...]
    out_ref[...] = out.astype(out_ref.dtype)


# ----------------------------------------------------------------------------
# Wrapper
# ----------------------------------------------------------------------------
def _round_up(x, m):
    return -(-x // m) * m


def _choose_tile_e(E, D, tile_e):
    """Edge tile: multiple of 128, VMEM-aware, and split so the 1-D grid has
    >= 2 steps when E allows (feeds both v7x TensorCores)."""
    # Per-row VMEM for the pipelined streams (3 bf16 inputs + f32 output,
    # double-buffered): D * (3*2*2 + 4*2) = 20*D bytes.  Keep streams <= 24MiB.
    vmem_cap_rows = max(128, (24 * 1024 * 1024) // (20 * max(D, 1)))
    t = min(_round_up(tile_e, 128), _round_up(E, 128), _round_up(vmem_cap_rows, 128))
    if E > 128 and _round_up(E, t) // t < 2:
        t = max(128, _round_up(-(-E // 2), 128))
    return t


def _build_call(E_pad, D, tile_e, compute_dtype):
    edge_spec = pl.BlockSpec((tile_e, D), lambda i: (i, 0))
    # Constant index_map: Pallas keeps the same block resident across steps.
    w_spec = pl.BlockSpec((D, D), lambda i: (0, 0))
    b_spec = pl.BlockSpec((1, D), lambda i: (0, 0))

    itemsize = jnp.dtype(compute_dtype).itemsize
    cost = pl.CostEstimate(
        flops=2 * E_pad * (3 * D * D + D * D),
        transcendentals=0,
        bytes_accessed=(3 * E_pad * D * itemsize      # src/dest/edge streams
                        + E_pad * D * 4               # f32 output
                        + 4 * D * D * itemsize        # weights
                        + 2 * D * 4))                 # biases

    return pl.pallas_call(
        edge_mlp_kernel,
        out_shape=jax.ShapeDtypeStruct((E_pad, D), jnp.float32),
        grid_spec=pltpu.PrefetchScalarGridSpec(
            num_scalar_prefetch=0,
            grid=(E_pad // tile_e,),
            in_specs=[edge_spec, edge_spec, edge_spec,
                      w_spec, w_spec, w_spec, b_spec,
                      w_spec, b_spec],
            out_specs=edge_spec,
        ),
        compiler_params=pltpu.CompilerParams(
            dimension_semantics=("parallel",),
            # Fits v7x (64 MiB physical VMEM); at the real D=1024, tile_e=512
            # the kernel needs ~25-30 MiB.  On v5e/v6e (128 MiB) there is
            # headroom to raise tile_e further if desired.
            vmem_limit_bytes=48 * 1024 * 1024,
        ),
        cost_estimate=cost,
    )


def edge_model_forward(src, dest, edge_attr, params, *,
                       tile_e=512, compute_dtype=jnp.bfloat16):
    """src/dest/edge_attr: [E, D] float32. Returns [E, D] float32."""
    E, D = src.shape
    tile = _choose_tile_e(E, D, tile_e)
    E_pad = _round_up(E, tile)

    def pad(x):
        return jnp.pad(x, ((0, E_pad - E), (0, 0))) if E_pad != E else x

    cd = compute_dtype
    s = pad(src).astype(cd)
    d = pad(dest).astype(cd)
    e = pad(edge_attr).astype(cd)

    w1, b1, w2, b2 = params["w1"], params["b1"], params["w2"], params["b2"]
    # Split the first-layer weight [3D, D] into the three per-input blocks.
    w1a = w1[:D].astype(cd)
    w1b = w1[D:2 * D].astype(cd)
    w1c = w1[2 * D:].astype(cd)
    w2c = w2.astype(cd)
    b1_2d = b1.reshape(1, D).astype(jnp.float32)
    b2_2d = b2.reshape(1, D).astype(jnp.float32)

    out = _build_call(E_pad, D, tile, cd)(s, d, e, w1a, w1b, w1c, b1_2d, w2c, b2_2d)
    return out[:E] if E_pad != E else out


# ----------------------------------------------------------------------------
# Params / reference
# ----------------------------------------------------------------------------
def init_params(key, in_dim, div=1):
    """Deterministic init matching the shapes of EdgeModel's edge_mlp."""
    d = in_dim // div
    k1, k2, k3, k4 = jax.random.split(key, 4)
    # PyTorch Linear default: U(-1/sqrt(fan_in), 1/sqrt(fan_in)).
    lim1 = 1.0 / jnp.sqrt(3.0 * d)
    lim2 = 1.0 / jnp.sqrt(float(d))
    # Stored as [in_features, out_features] (transpose of torch's weight).
    w1 = jax.random.uniform(k1, (3 * d, d), jnp.float32, -lim1, lim1)
    b1 = jax.random.uniform(k2, (d,), jnp.float32, -lim1, lim1)
    w2 = jax.random.uniform(k3, (d, d), jnp.float32, -lim2, lim2)
    b2 = jax.random.uniform(k4, (d,), jnp.float32, -lim2, lim2)
    return {"w1": w1, "b1": b1, "w2": w2, "b2": b2}


def reference_forward(src, dest, edge_attr, params, compute_dtype=jnp.float32):
    """Pure-JAX reference; compute_dtype mirrors the kernel's operand dtype."""
    cd = compute_dtype
    x = jnp.concatenate([src, dest, edge_attr], axis=1).astype(cd)
    w1 = params["w1"].astype(cd)
    w2 = params["w2"].astype(cd)
    b1 = params["b1"].astype(jnp.float32)
    b2 = params["b2"].astype(jnp.float32)
    h = jnp.maximum(jnp.dot(x, w1, preferred_element_type=jnp.float32) + b1, 0.0)
    return jnp.dot(h.astype(cd), w2, preferred_element_type=jnp.float32) + b2


# ----------------------------------------------------------------------------
# Self-test
# ----------------------------------------------------------------------------
if __name__ == "__main__":
    in_dim = 128   # small, lane-aligned stand-in for the real 1024
    div = 1
    D = in_dim // div
    E = 300        # deliberately not a tile multiple: exercises the padded path

    key = jax.random.PRNGKey(0)
    kp, ks, kd, ke = jax.random.split(key, 4)
    params = init_params(kp, in_dim, div)

    src = jax.random.normal(ks, (E, D), jnp.float32)
    dest = jax.random.normal(kd, (E, D), jnp.float32)
    edge_attr = jax.random.normal(ke, (E, D), jnp.float32)

    out = jax.block_until_ready(edge_model_forward(src, dest, edge_attr, params))

    ref_bf16 = reference_forward(src, dest, edge_attr, params,
                                 compute_dtype=jnp.bfloat16)
    ref_f32 = reference_forward(src, dest, edge_attr, params,
                                compute_dtype=jnp.float32)

    assert out.shape == (E, D)
    # Exact-semantics check against a reference using the same bf16 operands.
    assert jnp.allclose(out, ref_bf16, atol=1e-2, rtol=1e-2), "mismatch vs bf16 reference"
    # Gross check against the full-f32 reference (bounded bf16 rounding error).
    assert jnp.allclose(out, ref_f32, atol=1e-1, rtol=1e-1), "mismatch vs f32 reference"

    print("KERNEL_OK")
</pallas_src>

<mosaic_0001>
module attributes {stable_mosaic.version = 11 : i64} {
  func.func @edge_mlp_kernel(%arg0: i32, %arg1: memref<256x128xbf16, #tpu.memory_space<vmem>>, %arg2: memref<256x128xbf16, #tpu.memory_space<vmem>>, %arg3: memref<256x128xbf16, #tpu.memory_space<vmem>>, %arg4: memref<128x128xbf16, #tpu.memory_space<vmem>>, %arg5: memref<128x128xbf16, #tpu.memory_space<vmem>>, %arg6: memref<128x128xbf16, #tpu.memory_space<vmem>>, %arg7: memref<1x128xf32, #tpu.memory_space<vmem>>, %arg8: memref<128x128xbf16, #tpu.memory_space<vmem>>, %arg9: memref<1x128xf32, #tpu.memory_space<vmem>>, %arg10: memref<256x128xf32, #tpu.memory_space<vmem>>) attributes {dimension_semantics = [#tpu.dimension_semantics<parallel>], iteration_bounds = array<i64: 2>, scalar_prefetch = 0 : i64, scratch_operands = 0 : i64, tpu.core_type = #tpu.core_type<tc>, window_params = [{transform_indices = @transform_0, window_bounds = array<i64: 256, 128>}, {transform_indices = @transform_1, window_bounds = array<i64: 256, 128>}, {transform_indices = @transform_2, window_bounds = array<i64: 256, 128>}, {pipeline_mode = #tpu.pipeline_mode<synchronous>, transform_indices = @transform_3, window_bounds = array<i64: 128, 128>}, {pipeline_mode = #tpu.pipeline_mode<synchronous>, transform_indices = @transform_4, window_bounds = array<i64: 128, 128>}, {pipeline_mode = #tpu.pipeline_mode<synchronous>, transform_indices = @transform_5, window_bounds = array<i64: 128, 128>}, {pipeline_mode = #tpu.pipeline_mode<synchronous>, transform_indices = @transform_6, window_bounds = array<i64: 1, 128>}, {pipeline_mode = #tpu.pipeline_mode<synchronous>, transform_indices = @transform_7, window_bounds = array<i64: 128, 128>}, {pipeline_mode = #tpu.pipeline_mode<synchronous>, transform_indices = @transform_8, window_bounds = array<i64: 1, 128>}, {transform_indices = @transform_9, window_bounds = array<i64: 256, 128>}]} {
    %c0 = arith.constant 0 : index
    %c0_0 = arith.constant 0 : index
    %0 = vector.load %arg1[%c0, %c0_0] : memref<256x128xbf16, #tpu.memory_space<vmem>>, vector<256x128xbf16>
    %c0_1 = arith.constant 0 : index
    %c0_2 = arith.constant 0 : index
    %1 = vector.load %arg4[%c0_1, %c0_2] : memref<128x128xbf16, #tpu.memory_space<vmem>>, vector<128x128xbf16>
    %cst = arith.constant dense<0.000000e+00> : vector<256x128xf32>
    %2 = tpu.matmul %0, %1, %cst {dimension_numbers = #tpu.dot_dimension_numbers<[1], [0], [0], [1], [0, 0, 1, 1], [], []>} : vector<256x128xbf16>, vector<128x128xbf16>, vector<256x128xf32> -> vector<256x128xf32>
    %c0_3 = arith.constant 0 : index
    %c0_4 = arith.constant 0 : index
    %3 = vector.load %arg2[%c0_3, %c0_4] : memref<256x128xbf16, #tpu.memory_space<vmem>>, vector<256x128xbf16>
    %c0_5 = arith.constant 0 : index
    %c0_6 = arith.constant 0 : index
    %4 = vector.load %arg5[%c0_5, %c0_6] : memref<128x128xbf16, #tpu.memory_space<vmem>>, vector<128x128xbf16>
    %cst_7 = arith.constant dense<0.000000e+00> : vector<256x128xf32>
    %5 = tpu.matmul %3, %4, %cst_7 {dimension_numbers = #tpu.dot_dimension_numbers<[1], [0], [0], [1], [0, 0, 1, 1], [], []>} : vector<256x128xbf16>, vector<128x128xbf16>, vector<256x128xf32> -> vector<256x128xf32>
    %6 = arith.addf %2, %5 : vector<256x128xf32>
    %c0_8 = arith.constant 0 : index
    %c0_9 = arith.constant 0 : index
    %7 = vector.load %arg3[%c0_8, %c0_9] : memref<256x128xbf16, #tpu.memory_space<vmem>>, vector<256x128xbf16>
    %c0_10 = arith.constant 0 : index
    %c0_11 = arith.constant 0 : index
    %8 = vector.load %arg6[%c0_10, %c0_11] : memref<128x128xbf16, #tpu.memory_space<vmem>>, vector<128x128xbf16>
    %cst_12 = arith.constant dense<0.000000e+00> : vector<256x128xf32>
    %9 = tpu.matmul %7, %8, %cst_12 {dimension_numbers = #tpu.dot_dimension_numbers<[1], [0], [0], [1], [0, 0, 1, 1], [], []>} : vector<256x128xbf16>, vector<128x128xbf16>, vector<256x128xf32> -> vector<256x128xf32>
    %10 = arith.addf %6, %9 : vector<256x128xf32>
    %c0_13 = arith.constant 0 : index
    %c0_14 = arith.constant 0 : index
    %11 = vector.load %arg7[%c0_13, %c0_14] : memref<1x128xf32, #tpu.memory_space<vmem>>, vector<1x128xf32>
    %12 = vector.broadcast %11 : vector<1x128xf32> to vector<256x128xf32>
    %13 = arith.addf %10, %12 : vector<256x128xf32>
    %cst_15 = arith.constant 0.000000e+00 : f32
    %14 = vector.broadcast %cst_15 : f32 to vector<256x128xf32>
    %15 = arith.maximumf %13, %14 : vector<256x128xf32>
    %16 = arith.truncf %15 : vector<256x128xf32> to vector<256x128xbf16>
    %c0_16 = arith.constant 0 : index
    %c0_17 = arith.constant 0 : index
    %17 = vector.load %arg8[%c0_16, %c0_17] : memref<128x128xbf16, #tpu.memory_space<vmem>>, vector<128x128xbf16>
    %cst_18 = arith.constant dense<0.000000e+00> : vector<256x128xf32>
    %18 = tpu.matmul %16, %17, %cst_18 {dimension_numbers = #tpu.dot_dimension_numbers<[1], [0], [0], [1], [0, 0, 1, 1], [], []>} : vector<256x128xbf16>, vector<128x128xbf16>, vector<256x128xf32> -> vector<256x128xf32>
    %c0_19 = arith.constant 0 : index
    %c0_20 = arith.constant 0 : index
    %19 = vector.load %arg9[%c0_19, %c0_20] : memref<1x128xf32, #tpu.memory_space<vmem>>, vector<1x128xf32>
    %20 = vector.broadcast %19 : vector<1x128xf32> to vector<256x128xf32>
    %21 = arith.addf %18, %20 : vector<256x128xf32>
    %c0_21 = arith.constant 0 : index
    %c0_22 = arith.constant 0 : index
    %22 = vector.load %arg10[%c0_21, %c0_22] : memref<256x128xf32, #tpu.memory_space<vmem>>, vector<256x128xf32>
    tpu.vector_store %arg10[%c0_21, %c0_22], %21 {strides = array<i32>} : memref<256x128xf32, #tpu.memory_space<vmem>>, vector<256x128xf32>,
    return
  }
  func.func @transform_0(%arg0: i32) -> (i32, i32) {
    %c0_i32 = arith.constant 0 : i32
    %c0_i32_0 = arith.constant 0 : i32
    return %arg0, %c0_i32 : i32, i32
  }
  func.func @transform_1(%arg0: i32) -> (i32, i32) {
    %c0_i32 = arith.constant 0 : i32
    %c0_i32_0 = arith.constant 0 : i32
    return %arg0, %c0_i32 : i32, i32
  }
  func.func @transform_2(%arg0: i32) -> (i32, i32) {
    %c0_i32 = arith.constant 0 : i32
    %c0_i32_0 = arith.constant 0 : i32
    return %arg0, %c0_i32 : i32, i32
  }
  func.func @transform_3(%arg0: i32) -> (i32, i32) {
    %c0_i32 = arith.constant 0 : i32
    %c0_i32_0 = arith.constant 0 : i32
    %c0_i32_1 = arith.constant 0 : i32
    return %c0_i32, %c0_i32_0 : i32, i32
  }
  func.func @transform_4(%arg0: i32) -> (i32, i32) {
    %c0_i32 = arith.constant 0 : i32
    %c0_i32_0 = arith.constant 0 : i32
    %c0_i32_1 = arith.constant 0 : i32
    return %c0_i32, %c0_i32_0 : i32, i32
  }
  func.func @transform_5(%arg0: i32) -> (i32, i32) {
    %c0_i32 = arith.constant 0 : i32
    %c0_i32_0 = arith.constant 0 : i32
    %c0_i32_1 = arith.constant 0 : i32
    return %c0_i32, %c0_i32_0 : i32, i32
  }
  func.func @transform_6(%arg0: i32) -> (i32, i32) {
    %c0_i32 = arith.constant 0 : i32
    %c0_i32_0 = arith.constant 0 : i32
    %c0_i32_1 = arith.constant 0 : i32
    return %c0_i32, %c0_i32_0 : i32, i32
  }
  func.func @transform_7(%arg0: i32) -> (i32, i32) {
    %c0_i32 = arith.constant 0 : i32
    %c0_i32_0 = arith.constant 0 : i32
    %c0_i32_1 = arith.constant 0 : i32
    return %c0_i32, %c0_i32_0 : i32, i32
  }
  func.func @transform_8(%arg0: i32) -> (i32, i32) {
    %c0_i32 = arith.constant 0 : i32
    %c0_i32_0 = arith.constant 0 : i32
    %c0_i32_1 = arith.constant 0 : i32
    return %c0_i32, %c0_i32_0 : i32, i32
  }
  func.func @transform_9(%arg0: i32) -> (i32, i32) {
    %c0_i32 = arith.constant 0 : i32
    %c0_i32_0 = arith.constant 0 : i32
    return %arg0, %c0_i32 : i32, i32
  }
}

</mosaic_0001>

<llo_original>
// kernel: tpu_custom_call.1
$region0: #{tpu_custom_call.1}
  #allocation0 [shape = 'u32[]', space=smem, size = 0x4, offset = 0x4, fixed_abs, tag = 'smem constant byte address 0x4 - core index']
  #allocation1 [shape = 'u32[72,128]{1,0:T(1,128)}', space=vmem, size = 0x9000, scoped, tag = 'internal scratch']
  %s0 = inlined_call_operand.hbm [shape: bf16[512,128], index: 0, kind: input, shape index: {}]
  %s1 = inlined_call_operand.hbm [shape: bf16[512,128], index: 1, kind: input, shape index: {}]
  %s2 = inlined_call_operand.hbm [shape: bf16[512,128], index: 2, kind: input, shape index: {}]
  %s3 = inlined_call_operand.hbm [shape: bf16[128,128], index: 3, kind: input, shape index: {}]
  %s4 = inlined_call_operand.hbm [shape: bf16[128,128], index: 4, kind: input, shape index: {}]
  %s5 = inlined_call_operand.hbm [shape: bf16[128,128], index: 5, kind: input, shape index: {}]
  %s6 = inlined_call_operand.vmem [shape: f32[1,128], index: 6, kind: input, shape index: {}]
  %s7 = inlined_call_operand.hbm [shape: bf16[128,128], index: 7, kind: input, shape index: {}]
  %s8 = inlined_call_operand.vmem [shape: f32[1,128], index: 8, kind: input, shape index: {}]
  %s9 = inlined_call_operand.hbm [shape: f32[512,128], index: 9, kind: output, shape index: {}]
  %s10 = sld [smem:[#allocation0]]
  $region97: #{tpu_custom_call.1} parent=0
    _
  %s12 = ssub.s32 1, %s10
  %s13 = scalar_select 0, %s12, %s10
  $region1: #{tpu_custom_call.1} parent=0
    #allocation2 [shape = 'u8[131072]{0}', space=vmem, size = 0x20000, scoped, tag = 'input window, operand 0']
    #allocation3 [shape = 's32[2]{0}', space=sflag, size = 0x8, scoped, tag = 'scoped memory for tpu_custom_call.1']
    #allocation4 [shape = 's32[2]{0}', space=sflag, size = 0x8, scoped, tag = 'scoped memory for tpu_custom_call.1']
    #allocation5 [shape = 'u8[131072]{0}', space=vmem, size = 0x20000, scoped, tag = 'input window, operand 1']
    #allocation6 [shape = 's32[2]{0}', space=sflag, size = 0x8, scoped, tag = 'scoped memory for tpu_custom_call.1']
    #allocation7 [shape = 'u8[131072]{0}', space=vmem, size = 0x20000, scoped, tag = 'input window, operand 2']
    #allocation8 [shape = 'u8[32768]{0}', space=vmem, size = 0x8000, scoped, tag = 'input window, operand 3, single buffered']
    #allocation9 [shape = 's32[1]{0}', space=sflag, size = 0x4, scoped, tag = 'scoped memory for tpu_custom_call.1']
    #allocation10 [shape = 'u8[32768]{0}', space=vmem, size = 0x8000, scoped, tag = 'input window, operand 4, single buffered']
    #allocation11 [shape = 'u8[32768]{0}', space=vmem, size = 0x8000, scoped, tag = 'input window, operand 5, single buffered']
    #allocation12 [shape = 's32[1]{0}', space=sflag, size = 0x4, scoped, tag = 'scoped memory for tpu_custom_call.1']
    #allocation13 [shape = 'u8[32768]{0}', space=vmem, size = 0x8000, scoped, tag = 'input window, operand 7, single buffered']
    #allocation14 [shape = 'u8[262144]{0}', space=vmem, size = 0x40000, scoped, tag = 'output window, operand 0']
    %14 = vsyncpa [#allocation3], 0
    %s15 = scalar_lea.sflag [#allocation3], 1
    %16 = vsyncpa %s15, 0
    %17 = vsyncpa [#allocation6], 0
    %s18 = scalar_lea.sflag [#allocation6], 1
    %19 = vsyncpa %s18, 0
    %20 = vsyncpa [#allocation9], 0
    %21 = vsyncpa [#allocation12], 0
    %22 = vsyncpa [#allocation4], 0
    %s23 = scalar_lea.sflag [#allocation4], 1
    %24 = vsyncpa %s23, 0
    loop: start=0, step=1, limit=4
    $region2: #{tpu_custom_call.1} parent=1 // loop_pre_header
      _
    $region3: #{tpu_custom_call.1} parent=1 // loop_header
      %s26 = sphi 0, %s30
      %p27 = scmp.ge.s32.totalorder %s26, 4
      %s36 = sphi 0, %s38
      %s39 = sphi 0, %s36
      %s40 = sphi 0, %s39
      %s56 = sphi 0, %s40
      %s62 = sphi 0, %s64
      %s65 = sphi 0, %s62
      %s66 = sphi 0, %s65
      %s82 = sphi 0, %s66
      %s88 = sphi 0, %s90
      %s91 = sphi 0, %s88
      %s92 = sphi 0, %s91
      %s108 = sphi 0, %s92
      %s112 = sphi 0, %s112
      %s114 = sphi 0, %s112
      %s115 = sphi 0, %s114
      %s129 = sphi 0, %s115
      %s133 = sphi 0, %s133
      %s135 = sphi 0, %s133
      %s136 = sphi 0, %s135
      %s150 = sphi 0, %s136
      %s154 = sphi 0, %s154
      %s156 = sphi 0, %s154
      %s157 = sphi 0, %s156
      %s171 = sphi 0, %s157
      %s175 = sphi 0, %s175
      %s177 = sphi 0, %s175
      %s178 = sphi 0, %s177
      %s192 = sphi 0, %s178
      %s196 = sphi 0, %s196
      %s198 = sphi 0, %s196
      %s199 = sphi 0, %s198
      %s213 = sphi 0, %s199
      %s217 = sphi 0, %s217
      %s219 = sphi 0, %s217
      %s220 = sphi 0, %s219
      %s234 = sphi 0, %s220
      %s240 = sphi 0, %s242
      %s243 = sphi 0, %s240
      %s244 = sphi 0, %s243
      %s260 = sphi 0, %s244
    $region4: #{tpu_custom_call.1} parent=1 // loop_header_branch
      %29 = sbr.rel (%p27) target = $region8
    $region5: #{tpu_custom_call.1} parent=1 // loop_body
      %s31 = ssub.s32 %s26, 1
      %s32 = ssub.s32 %s26, 2
      %s33 = sadd.s32 %s26, 1
      %s34 = ssub.s32 %s26, %s33
      %p35 = scmp.eq.s32.totalorder %s34, 0
      %s37 = sadd.s32 %s36, 1
      %s38 = scalar_select %p35, %s36, %s37
      %p41 = pneg %p35
      %p42 = scmp.eq.s32.totalorder %s26, 1
      %p43 = por %p41, %p42
      %p44 = scmp.ne.s32.totalorder %s36, %s39
      %p45 = scmp.eq.s32.totalorder %s26, 0
      %p46 = por %p44, %p45
      %p47 = scmp.ne.s32.totalorder %s36, %s39
      %p48 = scmp.eq.s32.totalorder %s31, 1
      %p49 = por %p47, %p48
      %p50 = scmp.ne.s32.totalorder %s39, %s40
      %p51 = scmp.eq.s32.totalorder %s31, 0
      %p52 = por %p50, %p51
      %p53 = scmp.ne.s32.totalorder %s39, %s40
      %p54 = scmp.eq.s32.totalorder %s32, 1
      %p55 = por %p53, %p54
      %p57 = scmp.ne.s32.totalorder %s40, %s56
      %p58 = scmp.eq.s32.totalorder %s32, 0
      %p59 = por %p57, %p58
      %s60 = ssub.s32 %s26, %s33
      %p61 = scmp.eq.s32.totalorder %s60, 0
      %s63 = sadd.s32 %s62, 1
      %s64 = scalar_select %p61, %s62, %s63
      %p67 = pneg %p61
      %p68 = scmp.eq.s32.totalorder %s26, 1
      %p69 = por %p67, %p68
      %p70 = scmp.ne.s32.totalorder %s62, %s65
      %p71 = scmp.eq.s32.totalorder %s26, 0
      %p72 = por %p70, %p71
      %p73 = scmp.ne.s32.totalorder %s62, %s65
      %p74 = scmp.eq.s32.totalorder %s31, 1
      %p75 = por %p73, %p74
      %p76 = scmp.ne.s32.totalorder %s65, %s66
      %p77 = scmp.eq.s32.totalorder %s31, 0
      %p78 = por %p76, %p77
      %p79 = scmp.ne.s32.totalorder %s65, %s66
      %p80 = scmp.eq.s32.totalorder %s32, 1
      %p81 = por %p79, %p80
      %p83 = scmp.ne.s32.totalorder %s66, %s82
      %p84 = scmp.eq.s32.totalorder %s32, 0
      %p85 = por %p83, %p84
      %s86 = ssub.s32 %s26, %s33
      %p87 = scmp.eq.s32.totalorder %s86, 0
      %s89 = sadd.s32 %s88, 1
      %s90 = scalar_select %p87, %s88, %s89
      %p93 = pneg %p87
      %p94 = scmp.eq.s32.totalorder %s26, 1
      %p95 = por %p93, %p94
      %p96 = scmp.ne.s32.totalorder %s88, %s91
      %p97 = scmp.eq.s32.totalorder %s26, 0
      %p98 = por %p96, %p97
      %p99 = scmp.ne.s32.totalorder %s88, %s91
      %p100 = scmp.eq.s32.totalorder %s31, 1
      %p101 = por %p99, %p100
      %p102 = scmp.ne.s32.totalorder %s91, %s92
      %p103 = scmp.eq.s32.totalorder %s31, 0
      %p104 = por %p102, %p103
      %p105 = scmp.ne.s32.totalorder %s91, %s92
      %p106 = scmp.eq.s32.totalorder %s32, 1
      %p107 = por %p105, %p106
      %p109 = scmp.ne.s32.totalorder %s92, %s108
      %p110 = scmp.eq.s32.totalorder %s32, 0
      %p111 = por %p109, %p110
      %s113 = sadd.s32 %s112, 1
      %p116 = scmp.eq.s32.totalorder %s26, 1
      %p117 = scmp.ne.s32.totalorder %s112, %s114
      %p118 = scmp.eq.s32.totalorder %s26, 0
      %p119 = por %p117, %p118
      %p120 = scmp.ne.s32.totalorder %s112, %s114
      %p121 = scmp.eq.s32.totalorder %s31, 1
      %p122 = por %p120, %p121
      %p123 = scmp.ne.s32.totalorder %s114, %s115
      %p124 = scmp.eq.s32.totalorder %s31, 0
      %p125 = por %p123, %p124
      %p126 = scmp.ne.s32.totalorder %s114, %s115
      %p127 = scmp.eq.s32.totalorder %s32, 1
      %p128 = por %p126, %p127
      %p130 = scmp.ne.s32.totalorder %s115, %s129
      %p131 = scmp.eq.s32.totalorder %s32, 0
      %p132 = por %p130, %p131
      %s134 = sadd.s32 %s133, 1
      %p137 = scmp.eq.s32.totalorder %s26, 1
      %p138 = scmp.ne.s32.totalorder %s133, %s135
      %p139 = scmp.eq.s32.totalorder %s26, 0
      %p140 = por %p138, %p139
      %p141 = scmp.ne.s32.totalorder %s133, %s135
      %p142 = scmp.eq.s32.totalorder %s31, 1
      %p143 = por %p141, %p142
      %p144 = scmp.ne.s32.totalorder %s135, %s136
      %p145 = scmp.eq.s32.totalorder %s31, 0
      %p146 = por %p144, %p145
      %p147 = scmp.ne.s32.totalorder %s135, %s136
      %p148 = scmp.eq.s32.totalorder %s32, 1
      %p149 = por %p147, %p148
      %p151 = scmp.ne.s32.totalorder %s136, %s150
      %p152 = scmp.eq.s32.totalorder %s32, 0
      %p153 = por %p151, %p152
      %s155 = sadd.s32 %s154, 1
      %p158 = scmp.eq.s32.totalorder %s26, 1
      %p159 = scmp.ne.s32.totalorder %s154, %s156
      %p160 = scmp.eq.s32.totalorder %s26, 0
      %p161 = por %p159, %p160
      %p162 = scmp.ne.s32.totalorder %s154, %s156
      %p163 = scmp.eq.s32.totalorder %s31, 1
      %p164 = por %p162, %p163
      %p165 = scmp.ne.s32.totalorder %s156, %s157
      %p166 = scmp.eq.s32.totalorder %s31, 0
      %p167 = por %p165, %p166
      %p168 = scmp.ne.s32.totalorder %s156, %s157
      %p169 = scmp.eq.s32.totalorder %s32, 1
      %p170 = por %p168, %p169
      %p172 = scmp.ne.s32.totalorder %s157, %s171
      %p173 = scmp.eq.s32.totalorder %s32, 0
      %p174 = por %p172, %p173
      %s176 = sadd.s32 %s175, 1
      %p179 = scmp.eq.s32.totalorder %s26, 1
      %p180 = scmp.ne.s32.totalorder %s175, %s177
      %p181 = scmp.eq.s32.totalorder %s26, 0
      %p182 = por %p180, %p181
      %p183 = scmp.ne.s32.totalorder %s175, %s177
      %p184 = scmp.eq.s32.totalorder %s31, 1
      %p185 = por %p183, %p184
      %p186 = scmp.ne.s32.totalorder %s177, %s178
      %p187 = scmp.eq.s32.totalorder %s31, 0
      %p188 = por %p186, %p187
      %p189 = scmp.ne.s32.totalorder %s177, %s178
      %p190 = scmp.eq.s32.totalorder %s32, 1
      %p191 = por %p189, %p190
      %p193 = scmp.ne.s32.totalorder %s178, %s192
      %p194 = scmp.eq.s32.totalorder %s32, 0
      %p195 = por %p193, %p194
      %s197 = sadd.s32 %s196, 1
      %p200 = scmp.eq.s32.totalorder %s26, 1
      %p201 = scmp.ne.s32.totalorder %s196, %s198
      %p202 = scmp.eq.s32.totalorder %s26, 0
      %p203 = por %p201, %p202
      %p204 = scmp.ne.s32.totalorder %s196, %s198
      %p205 = scmp.eq.s32.totalorder %s31, 1
      %p206 = por %p204, %p205
      %p207 = scmp.ne.s32.totalorder %s198, %s199
      %p208 = scmp.eq.s32.totalorder %s31, 0
      %p209 = por %p207, %p208
      %p210 = scmp.ne.s32.totalorder %s198, %s199
      %p211 = scmp.eq.s32.totalorder %s32, 1
      %p212 = por %p210, %p211
      %p214 = scmp.ne.s32.totalorder %s199, %s213
      %p215 = scmp.eq.s32.totalorder %s32, 0
      %p216 = por %p214, %p215
      %s218 = sadd.s32 %s217, 1
      %p221 = scmp.eq.s32.totalorder %s26, 1
      %p222 = scmp.ne.s32.totalorder %s217, %s219
      %p223 = scmp.eq.s32.totalorder %s26, 0
      %p224 = por %p222, %p223
      %p225 = scmp.ne.s32.totalorder %s217, %s219
      %p226 = scmp.eq.s32.totalorder %s31, 1
      %p227 = por %p225, %p226
      %p228 = scmp.ne.s32.totalorder %s219, %s220
      %p229 = scmp.eq.s32.totalorder %s31, 0
      %p230 = por %p228, %p229
      %p231 = scmp.ne.s32.totalorder %s219, %s220
      %p232 = scmp.eq.s32.totalorder %s32, 1
      %p233 = por %p231, %p232
      %p235 = scmp.ne.s32.totalorder %s220, %s234
      %p236 = scmp.eq.s32.totalorder %s32, 0
      %p237 = por %p235, %p236
      %s238 = ssub.s32 %s26, %s33
      %p239 = scmp.eq.s32.totalorder %s238, 0
      %s241 = sadd.s32 %s240, 1
      %s242 = scalar_select %p239, %s240, %s241
      %p245 = pneg %p239
      %p246 = scmp.eq.s32.totalorder %s26, 1
      %p247 = por %p245, %p246
      %p248 = scmp.ne.s32.totalorder %s240, %s243
      %p249 = scmp.eq.s32.totalorder %s26, 0
      %p250 = por %p248, %p249
      %p251 = scmp.ne.s32.totalorder %s240, %s243
      %p252 = scmp.eq.s32.totalorder %s31, 1
      %p253 = por %p251, %p252
      %p254 = scmp.ne.s32.totalorder %s243, %s244
      %p255 = scmp.eq.s32.totalorder %s31, 0
      %p256 = por %p254, %p255
      %p257 = scmp.ne.s32.totalorder %s243, %s244
      %p258 = scmp.eq.s32.totalorder %s32, 1
      %p259 = por %p257, %p258
      %p261 = scmp.ne.s32.totalorder %s244, %s260
      %p262 = scmp.eq.s32.totalorder %s32, 0
      %p263 = por %p261, %p262
      %p264 = scmp.le.s32.totalorder 1, %s26
      %p265 = scmp.lt.s32.totalorder %s26, 3
      %p266 = pnand %p264, %p265
      %p267 = pneg %p266
      // Predicated region
      $region9: #{tpu_custom_call.1} parent=5 // pred_check
        _
      $region10: #{tpu_custom_call.1} parent=5 // pred_check_branch
        %269 = sbr.rel (%p266) target = $region12
      $region11: #{tpu_custom_call.1} parent=5 // pred_region
        %s270 = ssub.s32 %s26, 1
        // Predicated region
        $region13: #{tpu_custom_call.1} parent=11 // pred_check
          %p271 = pneg %p125
        $region14: #{tpu_custom_call.1} parent=11 // pred_check_branch
          %273 = sbr.rel (%p271) target = $region16
        $region15: #{tpu_custom_call.1} parent=11 // pred_region
          %275 = vsyncadd [#allocation9], 0
          %s276 = sshll.u32 %s3, 4
          %s277 = int_to_ptr.hbm [resolvable:$true] %s276
          %s278 = sshll.u32 [#allocation8], 4
          %s279 = int_to_ptr.vmem [resolvable:$true] %s278
          %284 = dma.hbm_to_vmem [thread:$0]  %s277, 1024, %s279, [#allocation9], 64, 64, 4
        $region16: #{tpu_custom_call.1} parent=11 // pred_fallthru
          _
        // Predicated region
        $region17: #{tpu_custom_call.1} parent=11 // pred_check
          %p285 = pneg %p146
        $region18: #{tpu_custom_call.1} parent=11 // pred_check_branch
          %287 = sbr.rel (%p285) target = $region20
        $region19: #{tpu_custom_call.1} parent=11 // pred_region
          %289 = vsyncadd [#allocation9], 0
          %s290 = sshll.u32 %s4, 4
          %s291 = int_to_ptr.hbm [resolvable:$true] %s290
          %s292 = sshll.u32 [#allocation10], 4
          %s293 = int_to_ptr.vmem [resolvable:$true] %s292
          %298 = dma.hbm_to_vmem [thread:$0]  %s291, 1024, %s293, [#allocation9], 64, 64, 4
        $region20: #{tpu_custom_call.1} parent=11 // pred_fallthru
          _
        // Predicated region
        $region21: #{tpu_custom_call.1} parent=11 // pred_check
          %p299 = pneg %p167
        $region22: #{tpu_custom_call.1} parent=11 // pred_check_branch
          %301 = sbr.rel (%p299) target = $region24
        $region23: #{tpu_custom_call.1} parent=11 // pred_region
          %303 = vsyncadd [#allocation12], 0
          %s304 = sshll.u32 %s5, 4
          %s305 = int_to_ptr.hbm [resolvable:$true] %s304
          %s306 = sshll.u32 [#allocation11], 4
          %s307 = int_to_ptr.vmem [resolvable:$true] %s306
          %312 = dma.hbm_to_vmem [thread:$0]  %s305, 1024, %s307, [#allocation12], 64, 64, 4
        $region24: #{tpu_custom_call.1} parent=11 // pred_fallthru
          _
        // Predicated region
        $region25: #{tpu_custom_call.1} parent=11 // pred_check
          %p313 = pneg %p188
        $region26: #{tpu_custom_call.1} parent=11 // pred_check_branch
          %315 = sbr.rel (%p313) target = $region28
        $region27: #{tpu_custom_call.1} parent=11 // pred_region
          _
        $region28: #{tpu_custom_call.1} parent=11 // pred_fallthru
          _
        // Predicated region
        $region29: #{tpu_custom_call.1} parent=11 // pred_check
          %p316 = pneg %p209
        $region30: #{tpu_custom_call.1} parent=11 // pred_check_branch
          %318 = sbr.rel (%p316) target = $region32
        $region31: #{tpu_custom_call.1} parent=11 // pred_region
          %320 = vsyncadd [#allocation12], 0
          %s321 = sshll.u32 %s7, 4
          %s322 = int_to_ptr.hbm [resolvable:$true] %s321
          %s323 = sshll.u32 [#allocation13], 4
          %s324 = int_to_ptr.vmem [resolvable:$true] %s323
          %329 = dma.hbm_to_vmem [thread:$0]  %s322, 1024, %s324, [#allocation12], 64, 64, 4
        $region32: #{tpu_custom_call.1} parent=11 // pred_fallthru
          _
        // Predicated region
        $region33: #{tpu_custom_call.1} parent=11 // pred_check
          %p330 = pneg %p230
        $region34: #{tpu_custom_call.1} parent=11 // pred_check_branch
          %332 = sbr.rel (%p330) target = $region36
        $region35: #{tpu_custom_call.1} parent=11 // pred_region
          _
        $region36: #{tpu_custom_call.1} parent=11 // pred_fallthru
          _
      $region12: #{tpu_custom_call.1} parent=5 // pred_fallthru
        _
      %p333 = scmp.lt.s32.totalorder %s26, 2
      // Predicated region
      $region37: #{tpu_custom_call.1} parent=5 // pred_check
        %p334 = pneg %p333
      $region38: #{tpu_custom_call.1} parent=5 // pred_check_branch
        %336 = sbr.rel (%p334) target = $region40
      $region39: #{tpu_custom_call.1} parent=5 // pred_region
        // Predicated region
        $region41: #{tpu_custom_call.1} parent=39 // pred_check
          %p337 = pneg %p46
        $region42: #{tpu_custom_call.1} parent=39 // pred_check_branch
          %339 = sbr.rel (%p337) target = $region44
        $region43: #{tpu_custom_call.1} parent=39 // pred_region
          %s340 = sand.u32 %s36, 1
          %s341 = scalar_lea.sflag [#allocation3], %s340
          %s342 = sand.u32 %s36, 1
          %s343 = smul.addr %s342, 128
          %s344 = scalar_lea.vmem [#allocation2], %s343
          %s345 = smul.u32 32, %s26
          %347 = vsyncadd %s341, 0
          %s348 = smul.addr %s345, 4
          %s349 = scalar_lea.hbm %s0, %s348
          %s350 = sshll.u32 %s349, 4
          %s351 = int_to_ptr.hbm [resolvable:$true] %s350
          %s352 = sshll.u32 %s344, 4
          %s353 = int_to_ptr.vmem [resolvable:$true] %s352
          %358 = dma.hbm_to_vmem [thread:$0]  %s351, 2048, %s353, %s341, 64, 64, 4
        $region44: #{tpu_custom_call.1} parent=39 // pred_fallthru
          _
        // Predicated region
        $region45: #{tpu_custom_call.1} parent=39 // pred_check
          %p359 = pneg %p72
        $region46: #{tpu_custom_call.1} parent=39 // pred_check_branch
          %361 = sbr.rel (%p359) target = $region48
        $region47: #{tpu_custom_call.1} parent=39 // pred_region
          %s362 = sand.u32 %s26, 1
          %s363 = scalar_lea.sflag [#allocation6], %s362
          %s364 = sand.u32 %s62, 1
          %s365 = smul.addr %s364, 128
          %s366 = scalar_lea.vmem [#allocation5], %s365
          %s367 = smul.u32 32, %s26
          %369 = vsyncadd %s363, 0
          %s370 = smul.addr %s367, 4
          %s371 = scalar_lea.hbm %s1, %s370
          %s372 = sshll.u32 %s371, 4
          %s373 = int_to_ptr.hbm [resolvable:$true] %s372
          %s374 = sshll.u32 %s366, 4
          %s375 = int_to_ptr.vmem [resolvable:$true] %s374
          %380 = dma.hbm_to_vmem [thread:$0]  %s373, 2048, %s375, %s363, 64, 64, 4
        $region48: #{tpu_custom_call.1} parent=39 // pred_fallthru
          _
        // Predicated region
        $region49: #{tpu_custom_call.1} parent=39 // pred_check
          %p381 = pneg %p98
        $region50: #{tpu_custom_call.1} parent=39 // pred_check_branch
          %383 = sbr.rel (%p381) target = $region52
        $region51: #{tpu_custom_call.1} parent=39 // pred_region
          %s384 = sand.u32 %s26, 1
          %s385 = scalar_lea.sflag [#allocation6], %s384
          %s386 = sand.u32 %s88, 1
          %s387 = smul.addr %s386, 128
          %s388 = scalar_lea.vmem [#allocation7], %s387
          %s389 = smul.u32 32, %s26
          %391 = vsyncadd %s385, 0
          %s392 = smul.addr %s389, 4
          %s393 = scalar_lea.hbm %s2, %s392
          %s394 = sshll.u32 %s393, 4
          %s395 = int_to_ptr.hbm [resolvable:$true] %s394
          %s396 = sshll.u32 %s388, 4
          %s397 = int_to_ptr.vmem [resolvable:$true] %s396
          %402 = dma.hbm_to_vmem [thread:$0]  %s395, 2048, %s397, %s385, 64, 64, 4
        $region52: #{tpu_custom_call.1} parent=39 // pred_fallthru
          _
      $region40: #{tpu_custom_call.1} parent=5 // pred_fallthru
        _
      %p403 = scmp.le.s32.totalorder 1, %s26
      %p404 = scmp.lt.s32.totalorder %s26, 3
      %p405 = pnand %p403, %p404
      %p406 = pneg %p405
      // Predicated region
      $region53: #{tpu_custom_call.1} parent=5 // pred_check
        _
      $region54: #{tpu_custom_call.1} parent=5 // pred_check_branch
        %408 = sbr.rel (%p405) target = $region56
      $region55: #{tpu_custom_call.1} parent=5 // pred_region
        %s409 = ssub.s32 %s26, 1
        %s410 = sand.u32 %s39, 1
        %s411 = scalar_lea.sflag [#allocation3], %s410
        %s412 = sand.u32 %s39, 1
        %s413 = smul.addr %s412, 128
        %s414 = scalar_lea.vmem [#allocation2], %s413
        // Predicated region
        $region57: #{tpu_custom_call.1} parent=55 // pred_check
          %p415 = pneg %p52
        $region58: #{tpu_custom_call.1} parent=55 // pred_check_branch
          %417 = sbr.rel (%p415) target = $region60
        $region59: #{tpu_custom_call.1} parent=55 // pred_region
          %419 = dma.done %s411, 2048
        $region60: #{tpu_custom_call.1} parent=55 // pred_fallthru
          _
        %s420 = sand.u32 %s31, 1
        %s421 = scalar_lea.sflag [#allocation6], %s420
        %s422 = sand.u32 %s65, 1
        %s423 = smul.addr %s422, 128
        %s424 = scalar_lea.vmem [#allocation5], %s423
        // Predicated region
        $region61: #{tpu_custom_call.1} parent=55 // pred_check
          %p425 = pneg %p78
        $region62: #{tpu_custom_call.1} parent=55 // pred_check_branch
          %427 = sbr.rel (%p425) target = $region64
        $region63: #{tpu_custom_call.1} parent=55 // pred_region
          %429 = dma.done %s421, 2048
        $region64: #{tpu_custom_call.1} parent=55 // pred_fallthru
          _
        %s430 = sand.u32 %s31, 1
        %s431 = scalar_lea.sflag [#allocation6], %s430
        %s432 = sand.u32 %s91, 1
        %s433 = smul.addr %s432, 128
        %s434 = scalar_lea.vmem [#allocation7], %s433
        // Predicated region
        $region65: #{tpu_custom_call.1} parent=55 // pred_check
          %p435 = pneg %p104
        $region66: #{tpu_custom_call.1} parent=55 // pred_check_branch
          %437 = sbr.rel (%p435) target = $region68
        $region67: #{tpu_custom_call.1} parent=55 // pred_region
          %439 = dma.done %s431, 2048
        $region68: #{tpu_custom_call.1} parent=55 // pred_fallthru
          _
        // Predicated region
        $region69: #{tpu_custom_call.1} parent=55 // pred_check
          %p440 = pneg %p125
        $region70: #{tpu_custom_call.1} parent=55 // pred_check_branch
          %442 = sbr.rel (%p440) target = $region72
        $region71: #{tpu_custom_call.1} parent=55 // pred_region
          %444 = dma.done [#allocation9], 1024
        $region72: #{tpu_custom_call.1} parent=55 // pred_fallthru
          _
        // Predicated region
        $region73: #{tpu_custom_call.1} parent=55 // pred_check
          %p445 = pneg %p146
        $region74: #{tpu_custom_call.1} parent=55 // pred_check_branch
          %447 = sbr.rel (%p445) target = $region76
        $region75: #{tpu_custom_call.1} parent=55 // pred_region
          %449 = dma.done [#allocation9], 1024
        $region76: #{tpu_custom_call.1} parent=55 // pred_fallthru
          _
        // Predicated region
        $region77: #{tpu_custom_call.1} parent=55 // pred_check
          %p450 = pneg %p167
        $region78: #{tpu_custom_call.1} parent=55 // pred_check_branch
          %452 = sbr.rel (%p450) target = $region80
        $region79: #{tpu_custom_call.1} parent=55 // pred_region
          %454 = dma.done [#allocation12], 1024
        $region80: #{tpu_custom_call.1} parent=55 // pred_fallthru
          _
        // Predicated region
        $region81: #{tpu_custom_call.1} parent=55 // pred_check
          %p455 = pneg %p209
        $region82: #{tpu_custom_call.1} parent=55 // pred_check_branch
          %457 = sbr.rel (%p455) target = $region84
        $region83: #{tpu_custom_call.1} parent=55 // pred_region
          %459 = dma.done [#allocation12], 1024
        $region84: #{tpu_custom_call.1} parent=55 // pred_fallthru
          _
        %s460 = sand.u32 %s39, 1
        %s461 = scalar_lea.sflag [#allocation3], %s460
        %s462 = sand.u32 %s39, 1
        %s463 = smul.addr %s462, 128
        %s464 = scalar_lea.vmem [#allocation2], %s463
        %p465 = pneg %p52
        %p466 = pneg %p49
        %s467 = sand.u32 %s31, 1
        %s468 = scalar_lea.sflag [#allocation6], %s467
        %s469 = sand.u32 %s65, 1
        %s470 = smul.addr %s469, 128
        %s471 = scalar_lea.vmem [#allocation5], %s470
        %p472 = pneg %p78
        %p473 = pneg %p75
        %s474 = sand.u32 %s31, 1
        %s475 = scalar_lea.sflag [#allocation6], %s474
        %s476 = sand.u32 %s91, 1
        %s477 = smul.addr %s476, 128
        %s478 = scalar_lea.vmem [#allocation7], %s477
        %p479 = pneg %p104
        %p480 = pneg %p101
        %p481 = pneg %p125
        %p482 = pneg %p122
        %p483 = pneg %p146
        %p484 = pneg %p143
        %p485 = pneg %p167
        %p486 = pneg %p164
        %p487 = pneg %p188
        %p488 = pneg %p185
        %p489 = pneg %p209
        %p490 = pneg %p206
        %p491 = pneg %p230
        %p492 = pneg %p227
        %p493 = pneg %p256
        %p494 = pneg %p253
        %s495 = sand.u32 %s243, 1
        %s496 = scalar_lea.sflag [#allocation4], %s495
        %s497 = sand.u32 %s243, 1
        %s498 = smul.addr %s497, 256
        %s499 = scalar_lea.vmem [#allocation14], %s498
        %s500 = smul.u32 32, %s31
        %s501 = smul.u32 32, %s31
        %s502 = smul.u32 32, %s31
        %s503 = smul.u32 32, %s31
        %v504 = vld [vmem:[%s414] sm:$0xf]
        %v505 = vld [vmem:[%s414 + $0x4] sm:$0xf]
        %v506 = vld [vmem:[%s414 + $0x8] sm:$0xf]
        %v507 = vld [vmem:[%s414 + $0xc] sm:$0xf]
        %v508 = vld [vmem:[%s414 + $0x10] sm:$0xf]
        %v509 = vld [vmem:[%s414 + $0x14] sm:$0xf]
        %v510 = vld [vmem:[%s414 + $0x18] sm:$0xf]
        %v511 = vld [vmem:[%s414 + $0x1c] sm:$0xf]
        %v512 = vld [vmem:[%s414 + $0x20] sm:$0xf]
        %v513 = vld [vmem:[%s414 + $0x24] sm:$0xf]
        %v514 = vld [vmem:[%s414 + $0x28] sm:$0xf]
        %v515 = vld [vmem:[%s414 + $0x2c] sm:$0xf]
        %v516 = vld [vmem:[%s414 + $0x30] sm:$0xf]
        %v517 = vld [vmem:[%s414 + $0x34] sm:$0xf]
        %v518 = vld [vmem:[%s414 + $0x38] sm:$0xf]
        %v519 = vld [vmem:[%s414 + $0x3c] sm:$0xf]
        %v520 = vld [vmem:[%s414 + $0x40] sm:$0xf]
        %v521 = vld [vmem:[%s414 + $0x44] sm:$0xf]
        %v522 = vld [vmem:[%s414 + $0x48] sm:$0xf]
        %v523 = vld [vmem:[%s414 + $0x4c] sm:$0xf]
        %v524 = vld [vmem:[%s414 + $0x50] sm:$0xf]
        %v525 = vld [vmem:[%s414 + $0x54] sm:$0xf]
        %v526 = vld [vmem:[%s414 + $0x58] sm:$0xf]
        %v527 = vld [vmem:[%s414 + $0x5c] sm:$0xf]
        %v528 = vld [vmem:[%s414 + $0x60] sm:$0xf]
        %v529 = vld [vmem:[%s414 + $0x64] sm:$0xf]
        %v530 = vld [vmem:[%s414 + $0x68] sm:$0xf]
        %v531 = vld [vmem:[%s414 + $0x6c] sm:$0xf]
        %v532 = vld [vmem:[%s414 + $0x70] sm:$0xf]
        %v533 = vld [vmem:[%s414 + $0x74] sm:$0xf]
        %v534 = vld [vmem:[%s414 + $0x78] sm:$0xf]
        %v535 = vld [vmem:[%s414 + $0x7c] sm:$0xf]
        %v536 = vld [vmem:[#allocation8] sm:$0xf]
        %v537 = vld [vmem:[#allocation8 + $0x4] sm:$0xf]
        %v538 = vld [vmem:[#allocation8 + $0x8] sm:$0xf]
        %v539 = vld [vmem:[#allocation8 + $0xc] sm:$0xf]
        %v540 = vld [vmem:[#allocation8 + $0x10] sm:$0xf]
        %v541 = vld [vmem:[#allocation8 + $0x14] sm:$0xf]
        %v542 = vld [vmem:[#allocation8 + $0x18] sm:$0xf]
        %v543 = vld [vmem:[#allocation8 + $0x1c] sm:$0xf]
        %v544 = vld [vmem:[#allocation8 + $0x20] sm:$0xf]
        %v545 = vld [vmem:[#allocation8 + $0x24] sm:$0xf]
        %v546 = vld [vmem:[#allocation8 + $0x28] sm:$0xf]
        %v547 = vld [vmem:[#allocation8 + $0x2c] sm:$0xf]
        %v548 = vld [vmem:[#allocation8 + $0x30] sm:$0xf]
        %v549 = vld [vmem:[#allocation8 + $0x34] sm:$0xf]
        %v550 = vld [vmem:[#allocation8 + $0x38] sm:$0xf]
        %v551 = vld [vmem:[#allocation8 + $0x3c] sm:$0xf]
        %v552 = vld [vmem:[%s424] sm:$0xf]
        %v553 = vld [vmem:[%s424 + $0x4] sm:$0xf]
        %v554 = vld [vmem:[%s424 + $0x8] sm:$0xf]
        %v555 = vld [vmem:[%s424 + $0xc] sm:$0xf]
        %v556 = vld [vmem:[%s424 + $0x10] sm:$0xf]
        %v557 = vld [vmem:[%s424 + $0x14] sm:$0xf]
        %v558 = vld [vmem:[%s424 + $0x18] sm:$0xf]
        %v559 = vld [vmem:[%s424 + $0x1c] sm:$0xf]
        %v560 = vld [vmem:[%s424 + $0x20] sm:$0xf]
        %v561 = vld [vmem:[%s424 + $0x24] sm:$0xf]
        %v562 = vld [vmem:[%s424 + $0x28] sm:$0xf]
        %v563 = vld [vmem:[%s424 + $0x2c] sm:$0xf]
        %v564 = vld [vmem:[%s424 + $0x30] sm:$0xf]
        %v565 = vld [vmem:[%s424 + $0x34] sm:$0xf]
        %v566 = vld [vmem:[%s424 + $0x38] sm:$0xf]
        %v567 = vld [vmem:[%s424 + $0x3c] sm:$0xf]
        %v568 = vld [vmem:[%s424 + $0x40] sm:$0xf]
        %v569 = vld [vmem:[%s424 + $0x44] sm:$0xf]
        %v570 = vld [vmem:[%s424 + $0x48] sm:$0xf]
        %v571 = vld [vmem:[%s424 + $0x4c] sm:$0xf]
        %v572 = vld [vmem:[%s424 + $0x50] sm:$0xf]
        %v573 = vld [vmem:[%s424 + $0x54] sm:$0xf]
        %v574 = vld [vmem:[%s424 + $0x58] sm:$0xf]
        %v575 = vld [vmem:[%s424 + $0x5c] sm:$0xf]
        %v576 = vld [vmem:[%s424 + $0x60] sm:$0xf]
        %v577 = vld [vmem:[%s424 + $0x64] sm:$0xf]
        %v578 = vld [vmem:[%s424 + $0x68] sm:$0xf]
        %v579 = vld [vmem:[%s424 + $0x6c] sm:$0xf]
        %v580 = vld [vmem:[%s424 + $0x70] sm:$0xf]
        %v581 = vld [vmem:[%s424 + $0x74] sm:$0xf]
        %v582 = vld [vmem:[%s424 + $0x78] sm:$0xf]
        %v583 = vld [vmem:[%s424 + $0x7c] sm:$0xf]
        %v584 = vld [vmem:[#allocation10] sm:$0xf]
        %v585 = vld [vmem:[#allocation10 + $0x4] sm:$0xf]
        %v586 = vld [vmem:[#allocation10 + $0x8] sm:$0xf]
        %v587 = vld [vmem:[#allocation10 + $0xc] sm:$0xf]
        %v588 = vld [vmem:[#allocation10 + $0x10] sm:$0xf]
        %v589 = vld [vmem:[#allocation10 + $0x14] sm:$0xf]
        %v590 = vld [vmem:[#allocation10 + $0x18] sm:$0xf]
        %v591 = vld [vmem:[#allocation10 + $0x1c] sm:$0xf]
        %v592 = vld [vmem:[#allocation10 + $0x20] sm:$0xf]
        %v593 = vld [vmem:[#allocation10 + $0x24] sm:$0xf]
        %v594 = vld [vmem:[#allocation10 + $0x28] sm:$0xf]
        %v595 = vld [vmem:[#allocation10 + $0x2c] sm:$0xf]
        %v596 = vld [vmem:[#allocation10 + $0x30] sm:$0xf]
        %v597 = vld [vmem:[#allocation10 + $0x34] sm:$0xf]
        %v598 = vld [vmem:[#allocation10 + $0x38] sm:$0xf]
        %v599 = vld [vmem:[#allocation10 + $0x3c] sm:$0xf]
        %v632 = vunpack.c.l.b16 %v552
        %v633 = vunpack.c.l.b16 %v553
        %v634 = vunpack.c.l.b16 %v554
        %v635 = vunpack.c.l.b16 %v555
        %v636 = vunpack.c.l.b16 %v556
        %v637 = vunpack.c.l.b16 %v557
        %v638 = vunpack.c.l.b16 %v558
        %v639 = vunpack.c.l.b16 %v559
        %v640 = vunpack.c.l.b16 %v560
        %v641 = vunpack.c.l.b16 %v561
        %v642 = vunpack.c.l.b16 %v562
        %v643 = vunpack.c.l.b16 %v563
        %v644 = vunpack.c.l.b16 %v564
        %v645 = vunpack.c.l.b16 %v565
        %v646 = vunpack.c.l.b16 %v566
        %v647 = vunpack.c.l.b16 %v567
        %v648 = vunpack.c.l.b16 %v568
        %v649 = vunpack.c.l.b16 %v569
        %v650 = vunpack.c.l.b16 %v570
        %v651 = vunpack.c.l.b16 %v571
        %v652 = vunpack.c.l.b16 %v572
        %v653 = vunpack.c.l.b16 %v573
        %v654 = vunpack.c.l.b16 %v574
        %v655 = vunpack.c.l.b16 %v575
        %v656 = vunpack.c.l.b16 %v576
        %v657 = vunpack.c.l.b16 %v577
        %v658 = vunpack.c.l.b16 %v578
        %v659 = vunpack.c.l.b16 %v579
        %v660 = vunpack.c.l.b16 %v580
        %v661 = vunpack.c.l.b16 %v581
        %v662 = vunpack.c.l.b16 %v582
        %v663 = vunpack.c.l.b16 %v583
        %v664 = vpack.c.b16 %v633, %v632
        %v665 = vpack.c.b16 %v635, %v634
        %v666 = vpack.c.b16 %v637, %v636
        %v667 = vpack.c.b16 %v639, %v638
        %v668 = vpack.c.b16 %v641, %v640
        %v669 = vpack.c.b16 %v643, %v642
        %v670 = vpack.c.b16 %v645, %v644
        %v671 = vpack.c.b16 %v647, %v646
        %v672 = vpack.c.b16 %v649, %v648
        %v673 = vpack.c.b16 %v651, %v650
        %v674 = vpack.c.b16 %v653, %v652
        %v675 = vpack.c.b16 %v655, %v654
        %v676 = vpack.c.b16 %v657, %v656
        %v677 = vpack.c.b16 %v659, %v658
        %v678 = vpack.c.b16 %v661, %v660
        %v679 = vpack.c.b16 %v663, %v662
        %v712 = vunpack.c.l.b16 %v584
        %v713 = vunpack.c.l.b16 %v585
        %v714 = vunpack.c.l.b16 %v586
        %v715 = vunpack.c.l.b16 %v587
        %v716 = vunpack.c.l.b16 %v588
        %v717 = vunpack.c.l.b16 %v589
        %v718 = vunpack.c.l.b16 %v590
        %v719 = vunpack.c.l.b16 %v591
        %v720 = vunpack.c.l.b16 %v592
        %v721 = vunpack.c.l.b16 %v593
        %v722 = vunpack.c.l.b16 %v594
        %v723 = vunpack.c.l.b16 %v595
        %v724 = vunpack.c.l.b16 %v596
        %v725 = vunpack.c.l.b16 %v597
        %v726 = vunpack.c.l.b16 %v598
        %v727 = vunpack.c.l.b16 %v599
        %v728 = vpack.c.b16 %v713, %v712
        %v729 = vpack.c.b16 %v715, %v714
        %v730 = vpack.c.b16 %v717, %v716
        %v731 = vpack.c.b16 %v719, %v718
        %v732 = vpack.c.b16 %v721, %v720
        %v733 = vpack.c.b16 %v723, %v722
        %v734 = vpack.c.b16 %v725, %v724
        %v735 = vpack.c.b16 %v727, %v726
        %744 = vmatpush.bf16.msra.mxu0 %v735
        %745 = vmatpush.bf16.msra.mxu0 %v734
        %746 = vmatpush.bf16.msra.mxu0 %v733
        %747 = vmatpush.bf16.msra.mxu0 %v732
        %748 = vmatpush.bf16.msra.mxu0 %v731
        %749 = vmatpush.bf16.msra.mxu0 %v730
        %750 = vmatpush.bf16.msra.mxu0 %v729
        %751 = vmatpush.bf16.msra.mxu0 %v728
        %752 = vmatmul.bf16.gmra.mxu0 %v664
        %v753 = vpop.f32.mrf.mxu0
        %v754 = vadd.f32 0.0, %v753
        %v755 = vpop.f32.mrf.mxu0
        %v756 = vadd.f32 0.0, %v755
        %757 = vmatmul.bf16.gmra.mxu0 %v665
        %v758 = vpop.f32.mrf.mxu0
        %v759 = vadd.f32 0.0, %v758
        %v760 = vpop.f32.mrf.mxu0
        %v761 = vadd.f32 0.0, %v760
        %762 = vmatmul.bf16.gmra.mxu0 %v666
        %v763 = vpop.f32.mrf.mxu0
        %v764 = vadd.f32 0.0, %v763
        %v765 = vpop.f32.mrf.mxu0
        %v766 = vadd.f32 0.0, %v765
        %767 = vmatmul.bf16.gmra.mxu0 %v667
        %v768 = vpop.f32.mrf.mxu0
        %v769 = vadd.f32 0.0, %v768
        %v770 = vpop.f32.mrf.mxu0
        %v771 = vadd.f32 0.0, %v770
        %772 = vmatmul.bf16.gmra.mxu0 %v668
        %v773 = vpop.f32.mrf.mxu0
        %v774 = vadd.f32 0.0, %v773
        %v775 = vpop.f32.mrf.mxu0
        %v776 = vadd.f32 0.0, %v775
        %777 = vmatmul.bf16.gmra.mxu0 %v669
        %v778 = vpop.f32.mrf.mxu0
        %v779 = vadd.f32 0.0, %v778
        %v780 = vpop.f32.mrf.mxu0
        %v781 = vadd.f32 0.0, %v780
        %782 = vmatmul.bf16.gmra.mxu0 %v670
        %v783 = vpop.f32.mrf.mxu0
        %v784 = vadd.f32 0.0, %v783
        %v785 = vpop.f32.mrf.mxu0
        %v786 = vadd.f32 0.0, %v785
        %787 = vmatmul.bf16.gmra.mxu0 %v671
        %v788 = vpop.f32.mrf.mxu0
        %v789 = vadd.f32 0.0, %v788
        %v790 = vpop.f32.mrf.mxu0
        %v791 = vadd.f32 0.0, %v790
        %792 = vmatmul.bf16.gmra.mxu0 %v672
        %v793 = vpop.f32.mrf.mxu0
        %v794 = vadd.f32 0.0, %v793
        %v795 = vpop.f32.mrf.mxu0
        %v796 = vadd.f32 0.0, %v795
        %797 = vmatmul.bf16.gmra.mxu0 %v673
        %v798 = vpop.f32.mrf.mxu0
        %v799 = vadd.f32 0.0, %v798
        %v800 = vpop.f32.mrf.mxu0
        %v801 = vadd.f32 0.0, %v800
        %802 = vmatmul.bf16.gmra.mxu0 %v674
        %v803 = vpop.f32.mrf.mxu0
        %v804 = vadd.f32 0.0, %v803
        %v805 = vpop.f32.mrf.mxu0
        %v806 = vadd.f32 0.0, %v805
        %807 = vmatmul.bf16.gmra.mxu0 %v675
        %v808 = vpop.f32.mrf.mxu0
        %v809 = vadd.f32 0.0, %v808
        %v810 = vpop.f32.mrf.mxu0
        %v811 = vadd.f32 0.0, %v810
        %812 = vmatmul.bf16.gmra.mxu0 %v676
        %v813 = vpop.f32.mrf.mxu0
        %v814 = vadd.f32 0.0, %v813
        %v815 = vpop.f32.mrf.mxu0
        %v816 = vadd.f32 0.0, %v815
        %817 = vmatmul.bf16.gmra.mxu0 %v677
        %v818 = vpop.f32.mrf.mxu0
        %v819 = vadd.f32 0.0, %v818
        %v820 = vpop.f32.mrf.mxu0
        %v821 = vadd.f32 0.0, %v820
        %822 = vmatmul.bf16.gmra.mxu0 %v678
        %v823 = vpop.f32.mrf.mxu0
        %v824 = vadd.f32 0.0, %v823
        %v825 = vpop.f32.mrf.mxu0
        %v826 = vadd.f32 0.0, %v825
        %827 = vmatmul.bf16.gmra.mxu0 %v679
        %v828 = vpop.f32.mrf.mxu0
        %v829 = vadd.f32 0.0, %v828
        %v830 = vpop.f32.mrf.mxu0
        %v831 = vadd.f32 0.0, %v830
        %832 = vdwg.mxu0
        %v865 = vunpack.c.l.b16 %v504
        %v866 = vunpack.c.l.b16 %v505
        %v867 = vunpack.c.l.b16 %v506
        %v868 = vunpack.c.l.b16 %v507
        %v869 = vunpack.c.l.b16 %v508
        %v870 = vunpack.c.l.b16 %v509
        %v871 = vunpack.c.l.b16 %v510
        %v872 = vunpack.c.l.b16 %v511
        %v873 = vunpack.c.l.b16 %v512
        %v874 = vunpack.c.l.b16 %v513
        %v875 = vunpack.c.l.b16 %v514
        %v876 = vunpack.c.l.b16 %v515
        %v877 = vunpack.c.l.b16 %v516
        %v878 = vunpack.c.l.b16 %v517
        %v879 = vunpack.c.l.b16 %v518
        %v880 = vunpack.c.l.b16 %v519
        %v881 = vunpack.c.l.b16 %v520
        %v882 = vunpack.c.l.b16 %v521
        %v883 = vunpack.c.l.b16 %v522
        %v884 = vunpack.c.l.b16 %v523
        %v885 = vunpack.c.l.b16 %v524
        %v886 = vunpack.c.l.b16 %v525
        %v887 = vunpack.c.l.b16 %v526
        %v888 = vunpack.c.l.b16 %v527
        %v889 = vunpack.c.l.b16 %v528
        %v890 = vunpack.c.l.b16 %v529
        %v891 = vunpack.c.l.b16 %v530
        %v892 = vunpack.c.l.b16 %v531
        %v893 = vunpack.c.l.b16 %v532
        %v894 = vunpack.c.l.b16 %v533
        %v895 = vunpack.c.l.b16 %v534
        %v896 = vunpack.c.l.b16 %v535
        %v897 = vpack.c.b16 %v866, %v865
        %v898 = vpack.c.b16 %v868, %v867
        %v899 = vpack.c.b16 %v870, %v869
        %v900 = vpack.c.b16 %v872, %v871
        %v901 = vpack.c.b16 %v874, %v873
        %v902 = vpack.c.b16 %v876, %v875
        %v903 = vpack.c.b16 %v878, %v877
        %v904 = vpack.c.b16 %v880, %v879
        %v905 = vpack.c.b16 %v882, %v881
        %v906 = vpack.c.b16 %v884, %v883
        %v907 = vpack.c.b16 %v886, %v885
        %v908 = vpack.c.b16 %v888, %v887
        %v909 = vpack.c.b16 %v890, %v889
        %v910 = vpack.c.b16 %v892, %v891
        %v911 = vpack.c.b16 %v894, %v893
        %v912 = vpack.c.b16 %v896, %v895
        %v945 = vunpack.c.l.b16 %v536
        %v946 = vunpack.c.l.b16 %v537
        %v947 = vunpack.c.l.b16 %v538
        %v948 = vunpack.c.l.b16 %v539
        %v949 = vunpack.c.l.b16 %v540
        %v950 = vunpack.c.l.b16 %v541
        %v951 = vunpack.c.l.b16 %v542
        %v952 = vunpack.c.l.b16 %v543
        %v953 = vunpack.c.l.b16 %v544
        %v954 = vunpack.c.l.b16 %v545
        %v955 = vunpack.c.l.b16 %v546
        %v956 = vunpack.c.l.b16 %v547
        %v957 = vunpack.c.l.b16 %v548
        %v958 = vunpack.c.l.b16 %v549
        %v959 = vunpack.c.l.b16 %v550
        %v960 = vunpack.c.l.b16 %v551
        %v961 = vpack.c.b16 %v946, %v945
        %v962 = vpack.c.b16 %v948, %v947
        %v963 = vpack.c.b16 %v950, %v949
        %v964 = vpack.c.b16 %v952, %v951
        %v965 = vpack.c.b16 %v954, %v953
        %v966 = vpack.c.b16 %v956, %v955
        %v967 = vpack.c.b16 %v958, %v957
        %v968 = vpack.c.b16 %v960, %v959
        %977 = vmatpush.bf16.msra.mxu0 %v968
        %978 = vmatpush.bf16.msra.mxu0 %v967
        %979 = vmatpush.bf16.msra.mxu0 %v966
        %980 = vmatpush.bf16.msra.mxu0 %v965
        %981 = vmatpush.bf16.msra.mxu0 %v964
        %982 = vmatpush.bf16.msra.mxu0 %v963
        %983 = vmatpush.bf16.msra.mxu0 %v962
        %984 = vmatpush.bf16.msra.mxu0 %v961
        %985 = vmatmul.bf16.gmra.mxu0 %v897
        %v986 = vpop.f32.mrf.mxu0
        %v987 = vadd.f32 %v754, %v986
        %v988 = vpop.f32.mrf.mxu0
        %v989 = vadd.f32 %v756, %v988
        %990 = vmatmul.bf16.gmra.mxu0 %v898
        %v991 = vpop.f32.mrf.mxu0
        %v992 = vadd.f32 %v759, %v991
        %v993 = vpop.f32.mrf.mxu0
        %v994 = vadd.f32 %v761, %v993
        %995 = vmatmul.bf16.gmra.mxu0 %v899
        %v996 = vpop.f32.mrf.mxu0
        %v997 = vadd.f32 %v764, %v996
        %v998 = vpop.f32.mrf.mxu0
        %v999 = vadd.f32 %v766, %v998
        %1000 = vmatmul.bf16.gmra.mxu0 %v900
        %v1001 = vpop.f32.mrf.mxu0
        %v1002 = vadd.f32 %v769, %v1001
        %v1003 = vpop.f32.mrf.mxu0
        %v1004 = vadd.f32 %v771, %v1003
        %1005 = vmatmul.bf16.gmra.mxu0 %v901
        %v1006 = vpop.f32.mrf.mxu0
        %v1007 = vadd.f32 %v774, %v1006
        %v1008 = vpop.f32.mrf.mxu0
        %v1009 = vadd.f32 %v776, %v1008
        %1010 = vmatmul.bf16.gmra.mxu0 %v902
        %v1011 = vpop.f32.mrf.mxu0
        %v1012 = vadd.f32 %v779, %v1011
        %v1013 = vpop.f32.mrf.mxu0
        %v1014 = vadd.f32 %v781, %v1013
        %1015 = vmatmul.bf16.gmra.mxu0 %v903
        %v1016 = vpop.f32.mrf.mxu0
        %v1017 = vadd.f32 %v784, %v1016
        %v1018 = vpop.f32.mrf.mxu0
        %v1019 = vadd.f32 %v786, %v1018
        %1020 = vmatmul.bf16.gmra.mxu0 %v904
        %v1021 = vpop.f32.mrf.mxu0
        %v1022 = vadd.f32 %v789, %v1021
        %v1023 = vpop.f32.mrf.mxu0
        %v1024 = vadd.f32 %v791, %v1023
        %1025 = vmatmul.bf16.gmra.mxu0 %v905
        %v1026 = vpop.f32.mrf.mxu0
        %v1027 = vadd.f32 %v794, %v1026
        %v1028 = vpop.f32.mrf.mxu0
        %v1029 = vadd.f32 %v796, %v1028
        %1030 = vmatmul.bf16.gmra.mxu0 %v906
        %v1031 = vpop.f32.mrf.mxu0
        %v1032 = vadd.f32 %v799, %v1031
        %v1033 = vpop.f32.mrf.mxu0
        %v1034 = vadd.f32 %v801, %v1033
        %1035 = vmatmul.bf16.gmra.mxu0 %v907
        %v1036 = vpop.f32.mrf.mxu0
        %v1037 = vadd.f32 %v804, %v1036
        %v1038 = vpop.f32.mrf.mxu0
        %v1039 = vadd.f32 %v806, %v1038
        %1040 = vmatmul.bf16.gmra.mxu0 %v908
        %v1041 = vpop.f32.mrf.mxu0
        %v1042 = vadd.f32 %v809, %v1041
        %v1043 = vpop.f32.mrf.mxu0
        %v1044 = vadd.f32 %v811, %v1043
        %1045 = vmatmul.bf16.gmra.mxu0 %v909
        %v1046 = vpop.f32.mrf.mxu0
        %v1047 = vadd.f32 %v814, %v1046
        %v1048 = vpop.f32.mrf.mxu0
        %v1049 = vadd.f32 %v816, %v1048
        %1050 = vmatmul.bf16.gmra.mxu0 %v910
        %v1051 = vpop.f32.mrf.mxu0
        %v1052 = vadd.f32 %v819, %v1051
        %v1053 = vpop.f32.mrf.mxu0
        %v1054 = vadd.f32 %v821, %v1053
        %1055 = vmatmul.bf16.gmra.mxu0 %v911
        %v1056 = vpop.f32.mrf.mxu0
        %v1057 = vadd.f32 %v824, %v1056
        %v1058 = vpop.f32.mrf.mxu0
        %v1059 = vadd.f32 %v826, %v1058
        %1060 = vmatmul.bf16.gmra.mxu0 %v912
        %v1061 = vpop.f32.mrf.mxu0
        %v1062 = vadd.f32 %v829, %v1061
        %v1063 = vpop.f32.mrf.mxu0
        %v1064 = vadd.f32 %v831, %v1063
        %1065 = vdwg.mxu0
        %v1066 = vld [vmem:[%s434] sm:$0xf]
        %v1067 = vld [vmem:[%s434 + $0x4] sm:$0xf]
        %v1068 = vld [vmem:[%s434 + $0x8] sm:$0xf]
        %v1069 = vld [vmem:[%s434 + $0xc] sm:$0xf]
        %v1070 = vld [vmem:[%s434 + $0x10] sm:$0xf]
        %v1071 = vld [vmem:[%s434 + $0x14] sm:$0xf]
        %v1072 = vld [vmem:[%s434 + $0x18] sm:$0xf]
        %v1073 = vld [vmem:[%s434 + $0x1c] sm:$0xf]
        %v1074 = vld [vmem:[%s434 + $0x20] sm:$0xf]
        %v1075 = vld [vmem:[%s434 + $0x24] sm:$0xf]
        %v1076 = vld [vmem:[%s434 + $0x28] sm:$0xf]
        %v1077 = vld [vmem:[%s434 + $0x2c] sm:$0xf]
        %v1078 = vld [vmem:[%s434 + $0x30] sm:$0xf]
        %v1079 = vld [vmem:[%s434 + $0x34] sm:$0xf]
        %v1080 = vld [vmem:[%s434 + $0x38] sm:$0xf]
        %v1081 = vld [vmem:[%s434 + $0x3c] sm:$0xf]
        %v1082 = vld [vmem:[%s434 + $0x40] sm:$0xf]
        %v1083 = vld [vmem:[%s434 + $0x44] sm:$0xf]
        %v1084 = vld [vmem:[%s434 + $0x48] sm:$0xf]
        %v1085 = vld [vmem:[%s434 + $0x4c] sm:$0xf]
        %v1086 = vld [vmem:[%s434 + $0x50] sm:$0xf]
        %v1087 = vld [vmem:[%s434 + $0x54] sm:$0xf]
        %v1088 = vld [vmem:[%s434 + $0x58] sm:$0xf]
        %v1089 = vld [vmem:[%s434 + $0x5c] sm:$0xf]
        %v1090 = vld [vmem:[%s434 + $0x60] sm:$0xf]
        %v1091 = vld [vmem:[%s434 + $0x64] sm:$0xf]
        %v1092 = vld [vmem:[%s434 + $0x68] sm:$0xf]
        %v1093 = vld [vmem:[%s434 + $0x6c] sm:$0xf]
        %v1094 = vld [vmem:[%s434 + $0x70] sm:$0xf]
        %v1095 = vld [vmem:[%s434 + $0x74] sm:$0xf]
        %v1096 = vld [vmem:[%s434 + $0x78] sm:$0xf]
        %v1097 = vld [vmem:[%s434 + $0x7c] sm:$0xf]
        %v1098 = vld [vmem:[#allocation11] sm:$0xf]
        %v1099 = vld [vmem:[#allocation11 + $0x4] sm:$0xf]
        %v1100 = vld [vmem:[#allocation11 + $0x8] sm:$0xf]
        %v1101 = vld [vmem:[#allocation11 + $0xc] sm:$0xf]
        %v1102 = vld [vmem:[#allocation11 + $0x10] sm:$0xf]
        %v1103 = vld [vmem:[#allocation11 + $0x14] sm:$0xf]
        %v1104 = vld [vmem:[#allocation11 + $0x18] sm:$0xf]
        %v1105 = vld [vmem:[#allocation11 + $0x1c] sm:$0xf]
        %v1106 = vld [vmem:[#allocation11 + $0x20] sm:$0xf]
        %v1107 = vld [vmem:[#allocation11 + $0x24] sm:$0xf]
        %v1108 = vld [vmem:[#allocation11 + $0x28] sm:$0xf]
        %v1109 = vld [vmem:[#allocation11 + $0x2c] sm:$0xf]
        %v1110 = vld [vmem:[#allocation11 + $0x30] sm:$0xf]
        %v1111 = vld [vmem:[#allocation11 + $0x34] sm:$0xf]
        %v1112 = vld [vmem:[#allocation11 + $0x38] sm:$0xf]
        %v1113 = vld [vmem:[#allocation11 + $0x3c] sm:$0xf]
        %v1146 = vunpack.c.l.b16 %v1066
        %v1147 = vunpack.c.l.b16 %v1067
        %v1148 = vunpack.c.l.b16 %v1068
        %v1149 = vunpack.c.l.b16 %v1069
        %v1150 = vunpack.c.l.b16 %v1070
        %v1151 = vunpack.c.l.b16 %v1071
        %v1152 = vunpack.c.l.b16 %v1072
        %v1153 = vunpack.c.l.b16 %v1073
        %v1154 = vunpack.c.l.b16 %v1074
        %v1155 = vunpack.c.l.b16 %v1075
        %v1156 = vunpack.c.l.b16 %v1076
        %v1157 = vunpack.c.l.b16 %v1077
        %v1158 = vunpack.c.l.b16 %v1078
        %v1159 = vunpack.c.l.b16 %v1079
        %v1160 = vunpack.c.l.b16 %v1080
        %v1161 = vunpack.c.l.b16 %v1081
        %v1162 = vunpack.c.l.b16 %v1082
        %v1163 = vunpack.c.l.b16 %v1083
        %v1164 = vunpack.c.l.b16 %v1084
        %v1165 = vunpack.c.l.b16 %v1085
        %v1166 = vunpack.c.l.b16 %v1086
        %v1167 = vunpack.c.l.b16 %v1087
        %v1168 = vunpack.c.l.b16 %v1088
        %v1169 = vunpack.c.l.b16 %v1089
        %v1170 = vunpack.c.l.b16 %v1090
        %v1171 = vunpack.c.l.b16 %v1091
        %v1172 = vunpack.c.l.b16 %v1092
        %v1173 = vunpack.c.l.b16 %v1093
        %v1174 = vunpack.c.l.b16 %v1094
        %v1175 = vunpack.c.l.b16 %v1095
        %v1176 = vunpack.c.l.b16 %v1096
        %v1177 = vunpack.c.l.b16 %v1097
        %v1178 = vpack.c.b16 %v1147, %v1146
        %v1179 = vpack.c.b16 %v1149, %v1148
        %v1180 = vpack.c.b16 %v1151, %v1150
        %v1181 = vpack.c.b16 %v1153, %v1152
        %v1182 = vpack.c.b16 %v1155, %v1154
        %v1183 = vpack.c.b16 %v1157, %v1156
        %v1184 = vpack.c.b16 %v1159, %v1158
        %v1185 = vpack.c.b16 %v1161, %v1160
        %v1186 = vpack.c.b16 %v1163, %v1162
        %v1187 = vpack.c.b16 %v1165, %v1164
        %v1188 = vpack.c.b16 %v1167, %v1166
        %v1189 = vpack.c.b16 %v1169, %v1168
        %v1190 = vpack.c.b16 %v1171, %v1170
        %v1191 = vpack.c.b16 %v1173, %v1172
        %v1192 = vpack.c.b16 %v1175, %v1174
        %v1193 = vpack.c.b16 %v1177, %v1176
        %v1226 = vunpack.c.l.b16 %v1098
        %v1227 = vunpack.c.l.b16 %v1099
        %v1228 = vunpack.c.l.b16 %v1100
        %v1229 = vunpack.c.l.b16 %v1101
        %v1230 = vunpack.c.l.b16 %v1102
        %v1231 = vunpack.c.l.b16 %v1103
        %v1232 = vunpack.c.l.b16 %v1104
        %v1233 = vunpack.c.l.b16 %v1105
        %v1234 = vunpack.c.l.b16 %v1106
        %v1235 = vunpack.c.l.b16 %v1107
        %v1236 = vunpack.c.l.b16 %v1108
        %v1237 = vunpack.c.l.b16 %v1109
        %v1238 = vunpack.c.l.b16 %v1110
        %v1239 = vunpack.c.l.b16 %v1111
        %v1240 = vunpack.c.l.b16 %v1112
        %v1241 = vunpack.c.l.b16 %v1113
        %v1242 = vpack.c.b16 %v1227, %v1226
        %v1243 = vpack.c.b16 %v1229, %v1228
        %v1244 = vpack.c.b16 %v1231, %v1230
        %v1245 = vpack.c.b16 %v1233, %v1232
        %v1246 = vpack.c.b16 %v1235, %v1234
        %v1247 = vpack.c.b16 %v1237, %v1236
        %v1248 = vpack.c.b16 %v1239, %v1238
        %v1249 = vpack.c.b16 %v1241, %v1240
        %1258 = vmatpush.bf16.msra.mxu0 %v1249
        %1259 = vmatpush.bf16.msra.mxu0 %v1248
        %1260 = vmatpush.bf16.msra.mxu0 %v1247
        %1261 = vmatpush.bf16.msra.mxu0 %v1246
        %1262 = vmatpush.bf16.msra.mxu0 %v1245
        %1263 = vmatpush.bf16.msra.mxu0 %v1244
        %1264 = vmatpush.bf16.msra.mxu0 %v1243
        %1265 = vmatpush.bf16.msra.mxu0 %v1242
        %1266 = vmatmul.bf16.gmra.mxu0 %v1178
        %v1267 = vpop.f32.mrf.mxu0
        %v1268 = vadd.f32 0.0, %v1267
        %v1269 = vpop.f32.mrf.mxu0
        %v1270 = vadd.f32 0.0, %v1269
        %1271 = vmatmul.bf16.gmra.mxu0 %v1179
        %v1272 = vpop.f32.mrf.mxu0
        %v1273 = vadd.f32 0.0, %v1272
        %v1274 = vpop.f32.mrf.mxu0
        %v1275 = vadd.f32 0.0, %v1274
        %1276 = vmatmul.bf16.gmra.mxu0 %v1180
        %v1277 = vpop.f32.mrf.mxu0
        %v1278 = vadd.f32 0.0, %v1277
        %v1279 = vpop.f32.mrf.mxu0
        %v1280 = vadd.f32 0.0, %v1279
        %1281 = vmatmul.bf16.gmra.mxu0 %v1181
        %v1282 = vpop.f32.mrf.mxu0
        %v1283 = vadd.f32 0.0, %v1282
        %v1284 = vpop.f32.mrf.mxu0
        %v1285 = vadd.f32 0.0, %v1284
        %1286 = vmatmul.bf16.gmra.mxu0 %v1182
        %v1287 = vpop.f32.mrf.mxu0
        %v1288 = vadd.f32 0.0, %v1287
        %v1289 = vpop.f32.mrf.mxu0
        %v1290 = vadd.f32 0.0, %v1289
        %1291 = vmatmul.bf16.gmra.mxu0 %v1183
        %v1292 = vpop.f32.mrf.mxu0
        %v1293 = vadd.f32 0.0, %v1292
        %v1294 = vpop.f32.mrf.mxu0
        %v1295 = vadd.f32 0.0, %v1294
        %1296 = vmatmul.bf16.gmra.mxu0 %v1184
        %v1297 = vpop.f32.mrf.mxu0
        %v1298 = vadd.f32 0.0, %v1297
        %v1299 = vpop.f32.mrf.mxu0
        %v1300 = vadd.f32 0.0, %v1299
        %1301 = vmatmul.bf16.gmra.mxu0 %v1185
        %v1302 = vpop.f32.mrf.mxu0
        %v1303 = vadd.f32 0.0, %v1302
        %v1304 = vpop.f32.mrf.mxu0
        %v1305 = vadd.f32 0.0, %v1304
        %1306 = vmatmul.bf16.gmra.mxu0 %v1186
        %v1307 = vpop.f32.mrf.mxu0
        %v1308 = vadd.f32 0.0, %v1307
        %v1309 = vpop.f32.mrf.mxu0
        %v1310 = vadd.f32 0.0, %v1309
        %1311 = vmatmul.bf16.gmra.mxu0 %v1187
        %v1312 = vpop.f32.mrf.mxu0
        %v1313 = vadd.f32 0.0, %v1312
        %v1314 = vpop.f32.mrf.mxu0
        %v1315 = vadd.f32 0.0, %v1314
        %1316 = vmatmul.bf16.gmra.mxu0 %v1188
        %v1317 = vpop.f32.mrf.mxu0
        %v1318 = vadd.f32 0.0, %v1317
        %v1319 = vpop.f32.mrf.mxu0
        %v1320 = vadd.f32 0.0, %v1319
        %1321 = vmatmul.bf16.gmra.mxu0 %v1189
        %v1322 = vpop.f32.mrf.mxu0
        %v1323 = vadd.f32 0.0, %v1322
        %v1324 = vpop.f32.mrf.mxu0
        %v1325 = vadd.f32 0.0, %v1324
        %1326 = vmatmul.bf16.gmra.mxu0 %v1190
        %v1327 = vpop.f32.mrf.mxu0
        %v1328 = vadd.f32 0.0, %v1327
        %v1329 = vpop.f32.mrf.mxu0
        %v1330 = vadd.f32 0.0, %v1329
        %1331 = vmatmul.bf16.gmra.mxu0 %v1191
        %v1332 = vpop.f32.mrf.mxu0
        %v1333 = vadd.f32 0.0, %v1332
        %v1334 = vpop.f32.mrf.mxu0
        %v1335 = vadd.f32 0.0, %v1334
        %1336 = vmatmul.bf16.gmra.mxu0 %v1192
        %v1337 = vpop.f32.mrf.mxu0
        %v1338 = vadd.f32 0.0, %v1337
        %v1339 = vpop.f32.mrf.mxu0
        %v1340 = vadd.f32 0.0, %v1339
        %1341 = vmatmul.bf16.gmra.mxu0 %v1193
        %v1342 = vpop.f32.mrf.mxu0
        %v1343 = vadd.f32 0.0, %v1342
        %v1344 = vpop.f32.mrf.mxu0
        %v1345 = vadd.f32 0.0, %v1344
        %1346 = vdwg.mxu0
        %v1347 = vadd.f32 %v987, %v1268
        %v1348 = vadd.f32 %v989, %v1270
        %v1349 = vadd.f32 %v992, %v1273
        %v1350 = vadd.f32 %v994, %v1275
        %v1351 = vadd.f32 %v997, %v1278
        %v1352 = vadd.f32 %v999, %v1280
        %v1353 = vadd.f32 %v1002, %v1283
        %v1354 = vadd.f32 %v1004, %v1285
        %v1355 = vadd.f32 %v1007, %v1288
        %v1356 = vadd.f32 %v1009, %v1290
        %v1357 = vadd.f32 %v1012, %v1293
        %v1358 = vadd.f32 %v1014, %v1295
        %v1359 = vadd.f32 %v1017, %v1298
        %v1360 = vadd.f32 %v1019, %v1300
        %v1361 = vadd.f32 %v1022, %v1303
        %v1362 = vadd.f32 %v1024, %v1305
        %v1363 = vadd.f32 %v1027, %v1308
        %v1364 = vadd.f32 %v1029, %v1310
        %v1365 = vadd.f32 %v1032, %v1313
        %v1366 = vadd.f32 %v1034, %v1315
        %v1367 = vadd.f32 %v1037, %v1318
        %v1368 = vadd.f32 %v1039, %v1320
        %v1369 = vadd.f32 %v1042, %v1323
        %v1370 = vadd.f32 %v1044, %v1325
        %v1371 = vadd.f32 %v1047, %v1328
        %v1372 = vadd.f32 %v1049, %v1330
        %v1373 = vadd.f32 %v1052, %v1333
        %v1374 = vadd.f32 %v1054, %v1335
        %v1375 = vadd.f32 %v1057, %v1338
        %v1376 = vadd.f32 %v1059, %v1340
        %v1377 = vadd.f32 %v1062, %v1343
        %v1378 = vadd.f32 %v1064, %v1345
        %v1379 = vld [vmem:[%s6] sm:$0x1]
        %v1381 = vperm.slane %v1379, 0
        %v1383 = vadd.f32 %v1347, %v1381
        %v1384 = vadd.f32 %v1348, %v1381
        %v1385 = vadd.f32 %v1349, %v1381
        %v1386 = vadd.f32 %v1350, %v1381
        %v1387 = vadd.f32 %v1351, %v1381
        %v1388 = vadd.f32 %v1352, %v1381
        %v1389 = vadd.f32 %v1353, %v1381
        %v1390 = vadd.f32 %v1354, %v1381
        %v1391 = vadd.f32 %v1355, %v1381
        %v1392 = vadd.f32 %v1356, %v1381
        %v1393 = vadd.f32 %v1357, %v1381
        %v1394 = vadd.f32 %v1358, %v1381
        %v1395 = vadd.f32 %v1359, %v1381
        %v1396 = vadd.f32 %v1360, %v1381
        %v1397 = vadd.f32 %v1361, %v1381
        %v1398 = vadd.f32 %v1362, %v1381
        %v1399 = vadd.f32 %v1363, %v1381
        %v1400 = vadd.f32 %v1364, %v1381
        %v1401 = vadd.f32 %v1365, %v1381
        %v1402 = vadd.f32 %v1366, %v1381
        %v1403 = vadd.f32 %v1367, %v1381
        %v1404 = vadd.f32 %v1368, %v1381
        %v1405 = vadd.f32 %v1369, %v1381
        %v1406 = vadd.f32 %v1370, %v1381
        %v1407 = vadd.f32 %v1371, %v1381
        %v1408 = vadd.f32 %v1372, %v1381
        %v1409 = vadd.f32 %v1373, %v1381
        %v1410 = vadd.f32 %v1374, %v1381
        %v1411 = vadd.f32 %v1375, %v1381
        %v1412 = vadd.f32 %v1376, %v1381
        %v1413 = vadd.f32 %v1377, %v1381
        %v1414 = vadd.f32 %v1378, %v1381
        %v1415 = vmax.f32 %v1383, 0.0
        %v1416 = vmax.f32 %v1384, 0.0
        %v1417 = vmax.f32 %v1385, 0.0
        %v1418 = vmax.f32 %v1386, 0.0
        %v1419 = vmax.f32 %v1387, 0.0
        %v1420 = vmax.f32 %v1388, 0.0
        %v1421 = vmax.f32 %v1389, 0.0
        %v1422 = vmax.f32 %v1390, 0.0
        %v1423 = vmax.f32 %v1391, 0.0
        %v1424 = vmax.f32 %v1392, 0.0
        %v1425 = vmax.f32 %v1393, 0.0
        %v1426 = vmax.f32 %v1394, 0.0
        %v1427 = vmax.f32 %v1395, 0.0
        %v1428 = vmax.f32 %v1396, 0.0
        %v1429 = vmax.f32 %v1397, 0.0
        %v1430 = vmax.f32 %v1398, 0.0
        %v1431 = vmax.f32 %v1399, 0.0
        %v1432 = vmax.f32 %v1400, 0.0
        %v1433 = vmax.f32 %v1401, 0.0
        %v1434 = vmax.f32 %v1402, 0.0
        %v1435 = vmax.f32 %v1403, 0.0
        %v1436 = vmax.f32 %v1404, 0.0
        %v1437 = vmax.f32 %v1405, 0.0
        %v1438 = vmax.f32 %v1406, 0.0
        %v1439 = vmax.f32 %v1407, 0.0
        %v1440 = vmax.f32 %v1408, 0.0
        %v1441 = vmax.f32 %v1409, 0.0
        %v1442 = vmax.f32 %v1410, 0.0
        %v1443 = vmax.f32 %v1411, 0.0
        %v1444 = vmax.f32 %v1412, 0.0
        %v1445 = vmax.f32 %v1413, 0.0
        %v1446 = vmax.f32 %v1414, 0.0
        %v1447 = vpack.c.bf16 %v1416, %v1415
        %v1448 = vpack.c.bf16 %v1418, %v1417
        %v1449 = vpack.c.bf16 %v1420, %v1419
        %v1450 = vpack.c.bf16 %v1422, %v1421
        %v1451 = vpack.c.bf16 %v1424, %v1423
        %v1452 = vpack.c.bf16 %v1426, %v1425
        %v1453 = vpack.c.bf16 %v1428, %v1427
        %v1454 = vpack.c.bf16 %v1430, %v1429
        %v1455 = vpack.c.bf16 %v1432, %v1431
        %v1456 = vpack.c.bf16 %v1434, %v1433
        %v1457 = vpack.c.bf16 %v1436, %v1435
        %v1458 = vpack.c.bf16 %v1438, %v1437
        %v1459 = vpack.c.bf16 %v1440, %v1439
        %v1460 = vpack.c.bf16 %v1442, %v1441
        %v1461 = vpack.c.bf16 %v1444, %v1443
        %v1462 = vpack.c.bf16 %v1446, %v1445
        %v1463 = vld [vmem:[#allocation13] sm:$0xf]
        %v1464 = vld [vmem:[#allocation13 + $0x4] sm:$0xf]
        %v1465 = vld [vmem:[#allocation13 + $0x8] sm:$0xf]
        %v1466 = vld [vmem:[#allocation13 + $0xc] sm:$0xf]
        %v1467 = vld [vmem:[#allocation13 + $0x10] sm:$0xf]
        %v1468 = vld [vmem:[#allocation13 + $0x14] sm:$0xf]
        %v1469 = vld [vmem:[#allocation13 + $0x18] sm:$0xf]
        %v1470 = vld [vmem:[#allocation13 + $0x1c] sm:$0xf]
        %v1471 = vld [vmem:[#allocation13 + $0x20] sm:$0xf]
        %v1472 = vld [vmem:[#allocation13 + $0x24] sm:$0xf]
        %v1473 = vld [vmem:[#allocation13 + $0x28] sm:$0xf]
        %v1474 = vld [vmem:[#allocation13 + $0x2c] sm:$0xf]
        %v1475 = vld [vmem:[#allocation13 + $0x30] sm:$0xf]
        %v1476 = vld [vmem:[#allocation13 + $0x34] sm:$0xf]
        %v1477 = vld [vmem:[#allocation13 + $0x38] sm:$0xf]
        %v1478 = vld [vmem:[#allocation13 + $0x3c] sm:$0xf]
        %v1479 = vld [vmem:[%s8] sm:$0x1]
        %v1481 = vperm.slane %v1479, 0
        %v1499 = vunpack.c.l.b16 %v1463
        %v1500 = vunpack.c.l.b16 %v1464
        %v1501 = vunpack.c.l.b16 %v1465
        %v1502 = vunpack.c.l.b16 %v1466
        %v1503 = vunpack.c.l.b16 %v1467
        %v1504 = vunpack.c.l.b16 %v1468
        %v1505 = vunpack.c.l.b16 %v1469
        %v1506 = vunpack.c.l.b16 %v1470
        %v1507 = vunpack.c.l.b16 %v1471
        %v1508 = vunpack.c.l.b16 %v1472
        %v1509 = vunpack.c.l.b16 %v1473
        %v1510 = vunpack.c.l.b16 %v1474
        %v1511 = vunpack.c.l.b16 %v1475
        %v1512 = vunpack.c.l.b16 %v1476
        %v1513 = vunpack.c.l.b16 %v1477
        %v1514 = vunpack.c.l.b16 %v1478
        %v1515 = vpack.c.b16 %v1500, %v1499
        %v1516 = vpack.c.b16 %v1502, %v1501
        %v1517 = vpack.c.b16 %v1504, %v1503
        %v1518 = vpack.c.b16 %v1506, %v1505
        %v1519 = vpack.c.b16 %v1508, %v1507
        %v1520 = vpack.c.b16 %v1510, %v1509
        %v1521 = vpack.c.b16 %v1512, %v1511
        %v1522 = vpack.c.b16 %v1514, %v1513
        %1531 = vmatpush.bf16.msra.mxu0 %v1522
        %1532 = vmatpush.bf16.msra.mxu0 %v1521
        %1533 = vmatpush.bf16.msra.mxu0 %v1520
        %1534 = vmatpush.bf16.msra.mxu0 %v1519
        %1535 = vmatpush.bf16.msra.mxu0 %v1518
        %1536 = vmatpush.bf16.msra.mxu0 %v1517
        %1537 = vmatpush.bf16.msra.mxu0 %v1516
        %1538 = vmatpush.bf16.msra.mxu0 %v1515
        %1539 = vmatmul.bf16.gmra.mxu0 %v1447
        %v1540 = vpop.f32.mrf.mxu0
        %v1541 = vadd.f32 %v1481, %v1540
        %v1542 = vpop.f32.mrf.mxu0
        %v1543 = vadd.f32 %v1481, %v1542
        %1544 = vmatmul.bf16.gmra.mxu0 %v1448
        %v1545 = vpop.f32.mrf.mxu0
        %v1546 = vadd.f32 %v1481, %v1545
        %v1547 = vpop.f32.mrf.mxu0
        %v1548 = vadd.f32 %v1481, %v1547
        %1549 = vmatmul.bf16.gmra.mxu0 %v1449
        %v1550 = vpop.f32.mrf.mxu0
        %v1551 = vadd.f32 %v1481, %v1550
        %v1552 = vpop.f32.mrf.mxu0
        %v1553 = vadd.f32 %v1481, %v1552
        %1554 = vmatmul.bf16.gmra.mxu0 %v1450
        %v1555 = vpop.f32.mrf.mxu0
        %v1556 = vadd.f32 %v1481, %v1555
        %v1557 = vpop.f32.mrf.mxu0
        %v1558 = vadd.f32 %v1481, %v1557
        %1559 = vmatmul.bf16.gmra.mxu0 %v1451
        %v1560 = vpop.f32.mrf.mxu0
        %v1561 = vadd.f32 %v1481, %v1560
        %v1562 = vpop.f32.mrf.mxu0
        %v1563 = vadd.f32 %v1481, %v1562
        %1564 = vmatmul.bf16.gmra.mxu0 %v1452
        %v1565 = vpop.f32.mrf.mxu0
        %v1566 = vadd.f32 %v1481, %v1565
        %v1567 = vpop.f32.mrf.mxu0
        %v1568 = vadd.f32 %v1481, %v1567
        %1569 = vmatmul.bf16.gmra.mxu0 %v1453
        %v1570 = vpop.f32.mrf.mxu0
        %v1571 = vadd.f32 %v1481, %v1570
        %v1572 = vpop.f32.mrf.mxu0
        %v1573 = vadd.f32 %v1481, %v1572
        %1574 = vmatmul.bf16.gmra.mxu0 %v1454
        %v1575 = vpop.f32.mrf.mxu0
        %v1576 = vadd.f32 %v1481, %v1575
        %v1577 = vpop.f32.mrf.mxu0
        %v1578 = vadd.f32 %v1481, %v1577
        %1579 = vmatmul.bf16.gmra.mxu0 %v1455
        %v1580 = vpop.f32.mrf.mxu0
        %v1581 = vadd.f32 %v1481, %v1580
        %v1582 = vpop.f32.mrf.mxu0
        %v1583 = vadd.f32 %v1481, %v1582
        %1584 = vmatmul.bf16.gmra.mxu0 %v1456
        %v1585 = vpop.f32.mrf.mxu0
        %v1586 = vadd.f32 %v1481, %v1585
        %v1587 = vpop.f32.mrf.mxu0
        %v1588 = vadd.f32 %v1481, %v1587
        %1589 = vmatmul.bf16.gmra.mxu0 %v1457
        %v1590 = vpop.f32.mrf.mxu0
        %v1591 = vadd.f32 %v1481, %v1590
        %v1592 = vpop.f32.mrf.mxu0
        %v1593 = vadd.f32 %v1481, %v1592
        %1594 = vmatmul.bf16.gmra.mxu0 %v1458
        %v1595 = vpop.f32.mrf.mxu0
        %v1596 = vadd.f32 %v1481, %v1595
        %v1597 = vpop.f32.mrf.mxu0
        %v1598 = vadd.f32 %v1481, %v1597
        %1599 = vmatmul.bf16.gmra.mxu0 %v1459
        %v1600 = vpop.f32.mrf.mxu0
        %v1601 = vadd.f32 %v1481, %v1600
        %v1602 = vpop.f32.mrf.mxu0
        %v1603 = vadd.f32 %v1481, %v1602
        %1604 = vmatmul.bf16.gmra.mxu0 %v1460
        %v1605 = vpop.f32.mrf.mxu0
        %v1606 = vadd.f32 %v1481, %v1605
        %v1607 = vpop.f32.mrf.mxu0
        %v1608 = vadd.f32 %v1481, %v1607
        %1609 = vmatmul.bf16.gmra.mxu0 %v1461
        %v1610 = vpop.f32.mrf.mxu0
        %v1611 = vadd.f32 %v1481, %v1610
        %v1612 = vpop.f32.mrf.mxu0
        %v1613 = vadd.f32 %v1481, %v1612
        %1614 = vmatmul.bf16.gmra.mxu0 %v1462
        %v1615 = vpop.f32.mrf.mxu0
        %v1616 = vadd.f32 %v1481, %v1615
        %v1617 = vpop.f32.mrf.mxu0
        %v1618 = vadd.f32 %v1481, %v1617
        %1619 = vdwg.mxu0
        %1620 = vst [vmem:[%s499] sm:$0xff] %v1541
        %1621 = vst [vmem:[%s499 + $0x8] sm:$0xff] %v1543
        %1622 = vst [vmem:[%s499 + $0x10] sm:$0xff] %v1546
        %1623 = vst [vmem:[%s499 + $0x18] sm:$0xff] %v1548
        %1624 = vst [vmem:[%s499 + $0x20] sm:$0xff] %v1551
        %1625 = vst [vmem:[%s499 + $0x28] sm:$0xff] %v1553
        %1626 = vst [vmem:[%s499 + $0x30] sm:$0xff] %v1556
        %1627 = vst [vmem:[%s499 + $0x38] sm:$0xff] %v1558
        %1628 = vst [vmem:[%s499 + $0x40] sm:$0xff] %v1561
        %1629 = vst [vmem:[%s499 + $0x48] sm:$0xff] %v1563
        %1630 = vst [vmem:[%s499 + $0x50] sm:$0xff] %v1566
        %1631 = vst [vmem:[%s499 + $0x58] sm:$0xff] %v1568
        %1632 = vst [vmem:[%s499 + $0x60] sm:$0xff] %v1571
        %1633 = vst [vmem:[%s499 + $0x68] sm:$0xff] %v1573
        %1634 = vst [vmem:[%s499 + $0x70] sm:$0xff] %v1576
        %1635 = vst [vmem:[%s499 + $0x78] sm:$0xff] %v1578
        %1636 = vst [vmem:[%s499 + $0x80] sm:$0xff] %v1581
        %1637 = vst [vmem:[%s499 + $0x88] sm:$0xff] %v1583
        %1638 = vst [vmem:[%s499 + $0x90] sm:$0xff] %v1586
        %1639 = vst [vmem:[%s499 + $0x98] sm:$0xff] %v1588
        %1640 = vst [vmem:[%s499 + $0xa0] sm:$0xff] %v1591
        %1641 = vst [vmem:[%s499 + $0xa8] sm:$0xff] %v1593
        %1642 = vst [vmem:[%s499 + $0xb0] sm:$0xff] %v1596
        %1643 = vst [vmem:[%s499 + $0xb8] sm:$0xff] %v1598
        %1644 = vst [vmem:[%s499 + $0xc0] sm:$0xff] %v1601
        %1645 = vst [vmem:[%s499 + $0xc8] sm:$0xff] %v1603
        %1646 = vst [vmem:[%s499 + $0xd0] sm:$0xff] %v1606
        %1647 = vst [vmem:[%s499 + $0xd8] sm:$0xff] %v1608
        %1648 = vst [vmem:[%s499 + $0xe0] sm:$0xff] %v1611
        %1649 = vst [vmem:[%s499 + $0xe8] sm:$0xff] %v1613
        %1650 = vst [vmem:[%s499 + $0xf0] sm:$0xff] %v1616
        %1651 = vst [vmem:[%s499 + $0xf8] sm:$0xff] %v1618
        %s1652 = sand.u32 %s243, 1
        %s1653 = scalar_lea.sflag [#allocation4], %s1652
        %s1654 = sand.u32 %s243, 1
        %s1655 = smul.addr %s1654, 256
        %s1656 = scalar_lea.vmem [#allocation14], %s1655
        // Predicated region
        $region85: #{tpu_custom_call.1} parent=55 // pred_check
          %p1657 = pneg %p253
        $region86: #{tpu_custom_call.1} parent=55 // pred_check_branch
          %1659 = sbr.rel (%p1657) target = $region88
        $region87: #{tpu_custom_call.1} parent=55 // pred_region
          %s1660 = smul.u32 32, %s31
          %1662 = vsyncadd %s1653, 0
          %s1663 = smul.addr %s1660, 8
          %s1664 = scalar_lea.hbm %s9, %s1663
          %s1665 = sshll.u32 %s1656, 4
          %s1666 = int_to_ptr.vmem [resolvable:$true] %s1665
          %s1667 = sshll.u32 %s1664, 4
          %s1668 = int_to_ptr.hbm [resolvable:$true] %s1667
          %1673 = dma.vmem_to_hbm [thread:$0]  %s1666, 4096, %s1668, %s1653, 128, 128, 8
        $region88: #{tpu_custom_call.1} parent=55 // pred_fallthru
          _
      $region56: #{tpu_custom_call.1} parent=5 // pred_fallthru
        _
      %p1674 = scmp.le.s32.totalorder 2, %s26
      // Predicated region
      $region89: #{tpu_custom_call.1} parent=5 // pred_check
        %p1675 = pneg %p1674
      $region90: #{tpu_custom_call.1} parent=5 // pred_check_branch
        %1677 = sbr.rel (%p1675) target = $region92
      $region91: #{tpu_custom_call.1} parent=5 // pred_region
        %s1678 = ssub.s32 %s26, 2
        // Predicated region
        $region93: #{tpu_custom_call.1} parent=91 // pred_check
          %p1679 = pneg %p259
        $region94: #{tpu_custom_call.1} parent=91 // pred_check_branch
          %1681 = sbr.rel (%p1679) target = $region96
        $region95: #{tpu_custom_call.1} parent=91 // pred_region
          %s1682 = sand.u32 %s244, 1
          %s1683 = scalar_lea.sflag [#allocation4], %s1682
          %s1684 = sand.u32 %s244, 1
          %s1685 = smul.addr %s1684, 256
          %s1686 = scalar_lea.vmem [#allocation14], %s1685
          %1688 = dma.done %s1683, 4096
        $region96: #{tpu_custom_call.1} parent=91 // pred_fallthru
          _
      $region92: #{tpu_custom_call.1} parent=5 // pred_fallthru
        _
    $region6: #{tpu_custom_call.1} parent=1 // loop_footer
      %s30 = sadd.s32 1, %s26
    $region7: #{tpu_custom_call.1} parent=1 // loop_footer_branch
      %25 = sbr.rel target = $region3
    $region8: #{tpu_custom_call.1} parent=1 // loop_exit
      _
    %1689 = vsyncpa [#allocation3], 1
    %s1690 = scalar_lea.sflag [#allocation3], 1
    %1691 = vsyncpa %s1690, 1
    %1692 = vsyncpa [#allocation6], 1
    %s1693 = scalar_lea.sflag [#allocation6], 1
    %1694 = vsyncpa %s1693, 1
    %1695 = vsyncpa [#allocation9], 1
    %1696 = vsyncpa [#allocation12], 1
    %1697 = vsyncpa [#allocation4], 1
    %s1698 = scalar_lea.sflag [#allocation4], 1
    %1699 = vsyncpa %s1698, 1

</llo_original>
